<compile_context>
chip_gen: v7x
topology: tpu7x:2x2x1
jax: 0.10.0
libtpu: 0.0.40
codegen_flags: <defaults>
</compile_context>

<pallas_src>
import jax
import jax.numpy as jnp
from jax.experimental import pallas as pl
from jax.experimental.pallas import tpu as pltpu

POOL_SIZES = (5, 9, 13)   # module default; forward iterates in reverse order
_K = 5                    # cascade pooling kernel size
_PAD = _K // 2


def _pad_neg_inf(x, axis, pad):
    """Pad `x` with -inf on both sides of `axis` (explicit concat; pad=2 only)."""
    shp = list(x.shape)
    shp[axis] = pad
    neg = jnp.full(shp, -jnp.inf, dtype=x.dtype)
    return jnp.concatenate([neg, x, neg], axis=axis)


def _maxpool5_same(x):
    """5x5 max pool, stride 1, padding 2 (-inf), on a (H, W, C) channels-last tile."""
    h, w, _ = x.shape
    # H window: leading axis -> pure slices, no lane/sublane data movement.
    xp = _pad_neg_inf(x, axis=0, pad=_PAD)
    m = xp[0:h]
    for i in range(1, _K):
        m = jnp.maximum(m, xp[i:i + h])
    # W window: sublane axis (cheap offsets; lane axis C untouched).
    mp = _pad_neg_inf(m, axis=1, pad=_PAD)
    out = mp[:, 0:w]
    for j in range(1, _K):
        out = jnp.maximum(out, mp[:, j:j + w])
    return out


def _spp_kernel(x_ref, o_ref):
    # x_ref: (1, H, W, Cb)   o_ref: (1, 4, H, W, Cb)
    # output channel groups: 0 -> mp13, 1 -> mp9, 2 -> mp5, 3 -> identity
    x = x_ref[0]
    o_ref[0, 3] = x                    # identity (store immediately)
    p1 = _maxpool5_same(x)             # == maxpool5(x)
    o_ref[0, 2] = p1
    p2 = _maxpool5_same(p1)            # == maxpool9(x)
    o_ref[0, 1] = p2
    p3 = _maxpool5_same(p2)            # == maxpool13(x)
    o_ref[0, 0] = p3


def _choose_c_block(c, h, w, itemsize):
    """Largest channel block whose ~16x-block working set stays under ~16 MiB."""
    budget_bytes = 16 * 1024 * 1024          # fits default scoped VMEM everywhere
    max_elems = max(1, budget_bytes // (16 * itemsize))
    max_cb = max(1, max_elems // (h * w))
    if c <= max_cb:
        return c                              # full channels in one block
    cb = (max_cb // 128) * 128                # lane-aligned divisor of C
    while cb >= 128:
        if c % cb == 0:
            return cb
        cb -= 128
    return c                                  # no valid tiling; fall back to full C


@jax.jit
def spatial_pyramid_pooling(x):
    """NCHW in, NCHW out; channel order [mp13, mp9, mp5, x] (matches PyTorch)."""
    n, c, h, w = x.shape
    x_nhwc = jnp.transpose(x, (0, 2, 3, 1))   # layout plumbing only (not compute)
    c_blk = _choose_c_block(c, h, w, x.dtype.itemsize)
    grid = (n, c // c_blk)

    out = pl.pallas_call(
        _spp_kernel,
        out_shape=jax.ShapeDtypeStruct((n, 4, h, w, c), x.dtype),
        grid=grid,
        in_specs=[pl.BlockSpec((1, h, w, c_blk), lambda b, cb: (b, 0, 0, cb))],
        out_specs=pl.BlockSpec((1, 4, h, w, c_blk),
                               lambda b, cb: (b, 0, 0, 0, cb)),
        compiler_params=pltpu.CompilerParams(
            dimension_semantics=("parallel", "parallel")),
        cost_estimate=pl.CostEstimate(
            flops=24 * n * c * h * w,                 # 3 stages x (4+4) max ops/elem
            transcendentals=0,
            bytes_accessed=5 * n * c * h * w * x.dtype.itemsize),
    )(x_nhwc)

    # (N, 4, H, W, C) -> (N, 4, C, H, W) -> (N, 4C, H, W)
    return jnp.transpose(out, (0, 1, 4, 2, 3)).reshape(n, 4 * c, h, w)


def _spp_reference(x):
    """Pure-JAX reference (lax.reduce_window) for correctness check."""
    feats = []
    for k in POOL_SIZES[::-1]:
        pad = k // 2
        feats.append(
            jax.lax.reduce_window(
                x,
                -jnp.inf,
                jax.lax.max,
                window_dimensions=(1, 1, k, k),
                window_strides=(1, 1, 1, 1),
                padding=((0, 0), (0, 0), (pad, pad), (pad, pad)),
            )
        )
    return jnp.concatenate(feats + [x], axis=1)


if __name__ == "__main__":
    key = jax.random.PRNGKey(0)
    x = jax.random.normal(key, (2, 4, 16, 16), dtype=jnp.float32)

    out = jax.block_until_ready(spatial_pyramid_pooling(x))
    ref = jax.block_until_ready(_spp_reference(x))

    assert out.shape == (2, 16, 16, 16), out.shape
    assert jnp.allclose(out, ref), "mismatch vs reference"

    print("KERNEL_OK")
</pallas_src>

<mosaic_0001>
module attributes {stable_mosaic.version = 11 : i64} {
  func.func @_spp_kernel(%arg0: i32, %arg1: i32, %arg2: memref<1x16x16x4xf32, #tpu.memory_space<vmem>>, %arg3: memref<1x4x16x16x4xf32, #tpu.memory_space<vmem>>) attributes {dimension_semantics = [#tpu.dimension_semantics<parallel>, #tpu.dimension_semantics<parallel>], iteration_bounds = array<i64: 2, 1>, scalar_prefetch = 0 : i64, scratch_operands = 0 : i64, tpu.core_type = #tpu.core_type<tc>, window_params = [{transform_indices = @transform_0, window_bounds = array<i64: 1, 16, 16, 4>}, {transform_indices = @transform_1, window_bounds = array<i64: 1, 4, 16, 16, 4>}]} {
    %c0 = arith.constant 0 : index
    %c0_0 = arith.constant 0 : index
    %c0_1 = arith.constant 0 : index
    %c0_2 = arith.constant 0 : index
    %0 = vector.load %arg2[%c0, %c0_0, %c0_1, %c0_2] : memref<1x16x16x4xf32, #tpu.memory_space<vmem>>, vector<1x16x16x4xf32>
    %1 = vector.shape_cast %0 : vector<1x16x16x4xf32> to vector<16x16x4xf32>
    %c0_3 = arith.constant 0 : index
    %c3 = arith.constant 3 : index
    %c0_4 = arith.constant 0 : index
    %c0_5 = arith.constant 0 : index
    %c0_6 = arith.constant 0 : index
    %2 = vector.load %arg3[%c0_3, %c3, %c0_4, %c0_5, %c0_6] : memref<1x4x16x16x4xf32, #tpu.memory_space<vmem>>, vector<1x1x16x16x4xf32>
    %3 = vector.shape_cast %2 : vector<1x1x16x16x4xf32> to vector<16x16x4xf32>
    %4 = vector.shape_cast %1 : vector<16x16x4xf32> to vector<1x1x16x16x4xf32>
    tpu.vector_store %arg3[%c0_3, %c3, %c0_4, %c0_5, %c0_6], %4 {strides = array<i32>} : memref<1x4x16x16x4xf32, #tpu.memory_space<vmem>>, vector<1x1x16x16x4xf32>,
    %cst = arith.constant 0xFF800000 : f32
    %5 = vector.broadcast %cst : f32 to vector<2x16x4xf32>
    %6 = tpu.concatenate %5, %1, %5 in 0 : vector<2x16x4xf32>, vector<16x16x4xf32>, vector<2x16x4xf32> -> vector<20x16x4xf32>
    %7 = vector.extract_strided_slice %6 {offsets = [0, 0, 0], sizes = [16, 16, 4], strides = [1, 1, 1]} : vector<20x16x4xf32> to vector<16x16x4xf32>
    %8 = vector.extract_strided_slice %6 {offsets = [1, 0, 0], sizes = [16, 16, 4], strides = [1, 1, 1]} : vector<20x16x4xf32> to vector<16x16x4xf32>
    %9 = arith.maximumf %7, %8 : vector<16x16x4xf32>
    %10 = vector.extract_strided_slice %6 {offsets = [2, 0, 0], sizes = [16, 16, 4], strides = [1, 1, 1]} : vector<20x16x4xf32> to vector<16x16x4xf32>
    %11 = arith.maximumf %9, %10 : vector<16x16x4xf32>
    %12 = vector.extract_strided_slice %6 {offsets = [3, 0, 0], sizes = [16, 16, 4], strides = [1, 1, 1]} : vector<20x16x4xf32> to vector<16x16x4xf32>
    %13 = arith.maximumf %11, %12 : vector<16x16x4xf32>
    %14 = vector.extract_strided_slice %6 {offsets = [4, 0, 0], sizes = [16, 16, 4], strides = [1, 1, 1]} : vector<20x16x4xf32> to vector<16x16x4xf32>
    %15 = arith.maximumf %13, %14 : vector<16x16x4xf32>
    %cst_7 = arith.constant 0xFF800000 : f32
    %16 = vector.broadcast %cst_7 : f32 to vector<16x2x4xf32>
    %17 = tpu.concatenate %16, %15, %16 in 1 : vector<16x2x4xf32>, vector<16x16x4xf32>, vector<16x2x4xf32> -> vector<16x20x4xf32>
    %18 = vector.extract_strided_slice %17 {offsets = [0, 0, 0], sizes = [16, 16, 4], strides = [1, 1, 1]} : vector<16x20x4xf32> to vector<16x16x4xf32>
    %19 = vector.extract_strided_slice %17 {offsets = [0, 1, 0], sizes = [16, 16, 4], strides = [1, 1, 1]} : vector<16x20x4xf32> to vector<16x16x4xf32>
    %20 = arith.maximumf %18, %19 : vector<16x16x4xf32>
    %21 = vector.extract_strided_slice %17 {offsets = [0, 2, 0], sizes = [16, 16, 4], strides = [1, 1, 1]} : vector<16x20x4xf32> to vector<16x16x4xf32>
    %22 = arith.maximumf %20, %21 : vector<16x16x4xf32>
    %23 = vector.extract_strided_slice %17 {offsets = [0, 3, 0], sizes = [16, 16, 4], strides = [1, 1, 1]} : vector<16x20x4xf32> to vector<16x16x4xf32>
    %24 = arith.maximumf %22, %23 : vector<16x16x4xf32>
    %25 = vector.extract_strided_slice %17 {offsets = [0, 4, 0], sizes = [16, 16, 4], strides = [1, 1, 1]} : vector<16x20x4xf32> to vector<16x16x4xf32>
    %26 = arith.maximumf %24, %25 : vector<16x16x4xf32>
    %c0_8 = arith.constant 0 : index
    %c2 = arith.constant 2 : index
    %c0_9 = arith.constant 0 : index
    %c0_10 = arith.constant 0 : index
    %c0_11 = arith.constant 0 : index
    %27 = vector.load %arg3[%c0_8, %c2, %c0_9, %c0_10, %c0_11] : memref<1x4x16x16x4xf32, #tpu.memory_space<vmem>>, vector<1x1x16x16x4xf32>
    %28 = vector.shape_cast %27 : vector<1x1x16x16x4xf32> to vector<16x16x4xf32>
    %29 = vector.shape_cast %26 : vector<16x16x4xf32> to vector<1x1x16x16x4xf32>
    tpu.vector_store %arg3[%c0_8, %c2, %c0_9, %c0_10, %c0_11], %29 {strides = array<i32>} : memref<1x4x16x16x4xf32, #tpu.memory_space<vmem>>, vector<1x1x16x16x4xf32>,
    %cst_12 = arith.constant 0xFF800000 : f32
    %30 = vector.broadcast %cst_12 : f32 to vector<2x16x4xf32>
    %31 = tpu.concatenate %30, %26, %30 in 0 : vector<2x16x4xf32>, vector<16x16x4xf32>, vector<2x16x4xf32> -> vector<20x16x4xf32>
    %32 = vector.extract_strided_slice %31 {offsets = [0, 0, 0], sizes = [16, 16, 4], strides = [1, 1, 1]} : vector<20x16x4xf32> to vector<16x16x4xf32>
    %33 = vector.extract_strided_slice %31 {offsets = [1, 0, 0], sizes = [16, 16, 4], strides = [1, 1, 1]} : vector<20x16x4xf32> to vector<16x16x4xf32>
    %34 = arith.maximumf %32, %33 : vector<16x16x4xf32>
    %35 = vector.extract_strided_slice %31 {offsets = [2, 0, 0], sizes = [16, 16, 4], strides = [1, 1, 1]} : vector<20x16x4xf32> to vector<16x16x4xf32>
    %36 = arith.maximumf %34, %35 : vector<16x16x4xf32>
    %37 = vector.extract_strided_slice %31 {offsets = [3, 0, 0], sizes = [16, 16, 4], strides = [1, 1, 1]} : vector<20x16x4xf32> to vector<16x16x4xf32>
    %38 = arith.maximumf %36, %37 : vector<16x16x4xf32>
    %39 = vector.extract_strided_slice %31 {offsets = [4, 0, 0], sizes = [16, 16, 4], strides = [1, 1, 1]} : vector<20x16x4xf32> to vector<16x16x4xf32>
    %40 = arith.maximumf %38, %39 : vector<16x16x4xf32>
    %cst_13 = arith.constant 0xFF800000 : f32
    %41 = vector.broadcast %cst_13 : f32 to vector<16x2x4xf32>
    %42 = tpu.concatenate %41, %40, %41 in 1 : vector<16x2x4xf32>, vector<16x16x4xf32>, vector<16x2x4xf32> -> vector<16x20x4xf32>
    %43 = vector.extract_strided_slice %42 {offsets = [0, 0, 0], sizes = [16, 16, 4], strides = [1, 1, 1]} : vector<16x20x4xf32> to vector<16x16x4xf32>
    %44 = vector.extract_strided_slice %42 {offsets = [0, 1, 0], sizes = [16, 16, 4], strides = [1, 1, 1]} : vector<16x20x4xf32> to vector<16x16x4xf32>
    %45 = arith.maximumf %43, %44 : vector<16x16x4xf32>
    %46 = vector.extract_strided_slice %42 {offsets = [0, 2, 0], sizes = [16, 16, 4], strides = [1, 1, 1]} : vector<16x20x4xf32> to vector<16x16x4xf32>
    %47 = arith.maximumf %45, %46 : vector<16x16x4xf32>
    %48 = vector.extract_strided_slice %42 {offsets = [0, 3, 0], sizes = [16, 16, 4], strides = [1, 1, 1]} : vector<16x20x4xf32> to vector<16x16x4xf32>
    %49 = arith.maximumf %47, %48 : vector<16x16x4xf32>
    %50 = vector.extract_strided_slice %42 {offsets = [0, 4, 0], sizes = [16, 16, 4], strides = [1, 1, 1]} : vector<16x20x4xf32> to vector<16x16x4xf32>
    %51 = arith.maximumf %49, %50 : vector<16x16x4xf32>
    %c0_14 = arith.constant 0 : index
    %c1 = arith.constant 1 : index
    %c0_15 = arith.constant 0 : index
    %c0_16 = arith.constant 0 : index
    %c0_17 = arith.constant 0 : index
    %52 = vector.load %arg3[%c0_14, %c1, %c0_15, %c0_16, %c0_17] : memref<1x4x16x16x4xf32, #tpu.memory_space<vmem>>, vector<1x1x16x16x4xf32>
    %53 = vector.shape_cast %52 : vector<1x1x16x16x4xf32> to vector<16x16x4xf32>
    %54 = vector.shape_cast %51 : vector<16x16x4xf32> to vector<1x1x16x16x4xf32>
    tpu.vector_store %arg3[%c0_14, %c1, %c0_15, %c0_16, %c0_17], %54 {strides = array<i32>} : memref<1x4x16x16x4xf32, #tpu.memory_space<vmem>>, vector<1x1x16x16x4xf32>,
    %cst_18 = arith.constant 0xFF800000 : f32
    %55 = vector.broadcast %cst_18 : f32 to vector<2x16x4xf32>
    %56 = tpu.concatenate %55, %51, %55 in 0 : vector<2x16x4xf32>, vector<16x16x4xf32>, vector<2x16x4xf32> -> vector<20x16x4xf32>
    %57 = vector.extract_strided_slice %56 {offsets = [0, 0, 0], sizes = [16, 16, 4], strides = [1, 1, 1]} : vector<20x16x4xf32> to vector<16x16x4xf32>
    %58 = vector.extract_strided_slice %56 {offsets = [1, 0, 0], sizes = [16, 16, 4], strides = [1, 1, 1]} : vector<20x16x4xf32> to vector<16x16x4xf32>
    %59 = arith.maximumf %57, %58 : vector<16x16x4xf32>
    %60 = vector.extract_strided_slice %56 {offsets = [2, 0, 0], sizes = [16, 16, 4], strides = [1, 1, 1]} : vector<20x16x4xf32> to vector<16x16x4xf32>
    %61 = arith.maximumf %59, %60 : vector<16x16x4xf32>
    %62 = vector.extract_strided_slice %56 {offsets = [3, 0, 0], sizes = [16, 16, 4], strides = [1, 1, 1]} : vector<20x16x4xf32> to vector<16x16x4xf32>
    %63 = arith.maximumf %61, %62 : vector<16x16x4xf32>
    %64 = vector.extract_strided_slice %56 {offsets = [4, 0, 0], sizes = [16, 16, 4], strides = [1, 1, 1]} : vector<20x16x4xf32> to vector<16x16x4xf32>
    %65 = arith.maximumf %63, %64 : vector<16x16x4xf32>
    %cst_19 = arith.constant 0xFF800000 : f32
    %66 = vector.broadcast %cst_19 : f32 to vector<16x2x4xf32>
    %67 = tpu.concatenate %66, %65, %66 in 1 : vector<16x2x4xf32>, vector<16x16x4xf32>, vector<16x2x4xf32> -> vector<16x20x4xf32>
    %68 = vector.extract_strided_slice %67 {offsets = [0, 0, 0], sizes = [16, 16, 4], strides = [1, 1, 1]} : vector<16x20x4xf32> to vector<16x16x4xf32>
    %69 = vector.extract_strided_slice %67 {offsets = [0, 1, 0], sizes = [16, 16, 4], strides = [1, 1, 1]} : vector<16x20x4xf32> to vector<16x16x4xf32>
    %70 = arith.maximumf %68, %69 : vector<16x16x4xf32>
    %71 = vector.extract_strided_slice %67 {offsets = [0, 2, 0], sizes = [16, 16, 4], strides = [1, 1, 1]} : vector<16x20x4xf32> to vector<16x16x4xf32>
    %72 = arith.maximumf %70, %71 : vector<16x16x4xf32>
    %73 = vector.extract_strided_slice %67 {offsets = [0, 3, 0], sizes = [16, 16, 4], strides = [1, 1, 1]} : vector<16x20x4xf32> to vector<16x16x4xf32>
    %74 = arith.maximumf %72, %73 : vector<16x16x4xf32>
    %75 = vector.extract_strided_slice %67 {offsets = [0, 4, 0], sizes = [16, 16, 4], strides = [1, 1, 1]} : vector<16x20x4xf32> to vector<16x16x4xf32>
    %76 = arith.maximumf %74, %75 : vector<16x16x4xf32>
    %c0_20 = arith.constant 0 : index
    %c0_21 = arith.constant 0 : index
    %c0_22 = arith.constant 0 : index
    %c0_23 = arith.constant 0 : index
    %c0_24 = arith.constant 0 : index
    %77 = vector.load %arg3[%c0_20, %c0_21, %c0_22, %c0_23, %c0_24] : memref<1x4x16x16x4xf32, #tpu.memory_space<vmem>>, vector<1x1x16x16x4xf32>
    %78 = vector.shape_cast %77 : vector<1x1x16x16x4xf32> to vector<16x16x4xf32>
    %79 = vector.shape_cast %76 : vector<16x16x4xf32> to vector<1x1x16x16x4xf32>
    tpu.vector_store %arg3[%c0_20, %c0_21, %c0_22, %c0_23, %c0_24], %79 {strides = array<i32>} : memref<1x4x16x16x4xf32, #tpu.memory_space<vmem>>, vector<1x1x16x16x4xf32>,
    return
  }
  func.func @transform_0(%arg0: i32, %arg1: i32) -> (i32, i32, i32, i32) {
    %c0_i32 = arith.constant 0 : i32
    %c0_i32_0 = arith.constant 0 : i32
    %c0_i32_1 = arith.constant 0 : i32
    return %arg0, %c0_i32, %c0_i32_0, %arg1 : i32, i32, i32, i32
  }
  func.func @transform_1(%arg0: i32, %arg1: i32) -> (i32, i32, i32, i32, i32) {
    %c0_i32 = arith.constant 0 : i32
    %c0_i32_0 = arith.constant 0 : i32
    %c0_i32_1 = arith.constant 0 : i32
    %c0_i32_2 = arith.constant 0 : i32
    return %arg0, %c0_i32, %c0_i32_0, %c0_i32_1, %arg1 : i32, i32, i32, i32, i32
  }
}

</mosaic_0001>

<llo_original>
// kernel: spatial_pyramid_pooling.1
$region0: #{spatial_pyramid_pooling.1}
  #allocation0 [shape = 'u32[]', space=smem, size = 0x4, offset = 0x4, fixed_abs, tag = 'smem constant byte address 0x4 - core index']
  #allocation1 [shape = 'u32[144,128]{1,0:T(1,128)}', space=vmem, size = 0x12000, scoped, tag = 'internal scratch']
  %s0 = inlined_call_operand.vmem [shape: f32[2,16,16,4], index: 0, kind: input, shape index: {}]
  %s1 = inlined_call_operand.vmem [shape: f32[2,4,16,16,4], index: 1, kind: output, shape index: {}]
  %s2 = sld [smem:[#allocation0]]
  $region37: #{spatial_pyramid_pooling.1} parent=0
    _
  %s4 = ssub.s32 1, %s2
  %s5 = scalar_select 0, %s4, %s2
  loop: start=0, step=1, limit=4
  $region2: #{spatial_pyramid_pooling.1} parent=0 // loop_pre_header
    _
  $region3: #{spatial_pyramid_pooling.1} parent=0 // loop_header
    %s7 = sphi 0, %s11
    %p8 = scmp.ge.s32.totalorder %s7, 4
    %s14 = sphi 0, %s26
    %s15 = sphi 0, %s22
    %s16 = sphi 0, %s14
    %s17 = sphi 0, %s15
    %s18 = sphi 0, %s16
    %s19 = sphi 0, %s17
    %s31 = sphi 0, %s33
    %s34 = sphi 0, %s31
    %s35 = sphi 0, %s34
    %s51 = sphi 0, %s35
    %s59 = sphi 0, %s61
    %s62 = sphi 0, %s59
    %s63 = sphi 0, %s62
    %s79 = sphi 0, %s63
  $region4: #{spatial_pyramid_pooling.1} parent=0 // loop_header_branch
    %10 = sbr.rel (%p8) target = $region8
  $region5: #{spatial_pyramid_pooling.1} parent=0 // loop_body
    %s12 = ssub.s32 %s7, 1
    %s13 = ssub.s32 %s7, 2
    %s20 = sadd.s32 1, %s15
    %p21 = scmp.ge.s32.totalorder %s20, 1
    %s22 = scalar_select %p21, 0, %s20
    %s23 = sadd.s32 1, %s14
    %s24 = scalar_select %p21, %s23, %s14
    %p25 = scmp.ge.s32.totalorder %s24, 2
    %s26 = scalar_select %p25, 0, %s24
    %s27 = ssub.s32 %s14, %s26
    %s28 = ssub.s32 %s15, %s22
    %s29 = sor.u32 %s27, %s28
    %p30 = scmp.eq.s32.totalorder %s29, 0
    %s32 = sadd.s32 %s31, 1
    %s33 = scalar_select %p30, %s31, %s32
    %p36 = pneg %p30
    %p37 = scmp.eq.s32.totalorder %s7, 1
    %p38 = por %p36, %p37
    %p39 = scmp.ne.s32.totalorder %s31, %s34
    %p40 = scmp.eq.s32.totalorder %s7, 0
    %p41 = por %p39, %p40
    %p42 = scmp.ne.s32.totalorder %s31, %s34
    %p43 = scmp.eq.s32.totalorder %s12, 1
    %p44 = por %p42, %p43
    %p45 = scmp.ne.s32.totalorder %s34, %s35
    %p46 = scmp.eq.s32.totalorder %s12, 0
    %p47 = por %p45, %p46
    %p48 = scmp.ne.s32.totalorder %s34, %s35
    %p49 = scmp.eq.s32.totalorder %s13, 1
    %p50 = por %p48, %p49
    %p52 = scmp.ne.s32.totalorder %s35, %s51
    %p53 = scmp.eq.s32.totalorder %s13, 0
    %p54 = por %p52, %p53
    %s55 = ssub.s32 %s14, %s26
    %s56 = ssub.s32 %s15, %s22
    %s57 = sor.u32 %s55, %s56
    %p58 = scmp.eq.s32.totalorder %s57, 0
    %s60 = sadd.s32 %s59, 1
    %s61 = scalar_select %p58, %s59, %s60
    %p64 = pneg %p58
    %p65 = scmp.eq.s32.totalorder %s7, 1
    %p66 = por %p64, %p65
    %p67 = scmp.ne.s32.totalorder %s59, %s62
    %p68 = scmp.eq.s32.totalorder %s7, 0
    %p69 = por %p67, %p68
    %p70 = scmp.ne.s32.totalorder %s59, %s62
    %p71 = scmp.eq.s32.totalorder %s12, 1
    %p72 = por %p70, %p71
    %p73 = scmp.ne.s32.totalorder %s62, %s63
    %p74 = scmp.eq.s32.totalorder %s12, 0
    %p75 = por %p73, %p74
    %p76 = scmp.ne.s32.totalorder %s62, %s63
    %p77 = scmp.eq.s32.totalorder %s13, 1
    %p78 = por %p76, %p77
    %p80 = scmp.ne.s32.totalorder %s63, %s79
    %p81 = scmp.eq.s32.totalorder %s13, 0
    %p82 = por %p80, %p81
    %p83 = scmp.le.s32.totalorder 1, %s7
    %p84 = scmp.lt.s32.totalorder %s7, 3
    %p85 = pnand %p83, %p84
    %p86 = pneg %p85
    // Predicated region
    $region9: #{spatial_pyramid_pooling.1} parent=5 // pred_check
      _
    $region10: #{spatial_pyramid_pooling.1} parent=5 // pred_check_branch
      %88 = sbr.rel (%p85) target = $region12
    $region11: #{spatial_pyramid_pooling.1} parent=5 // pred_region
      %s89 = ssub.s32 %s7, 1
    $region12: #{spatial_pyramid_pooling.1} parent=5 // pred_fallthru
      _
    %p90 = scmp.lt.s32.totalorder %s7, 2
    // Predicated region
    $region13: #{spatial_pyramid_pooling.1} parent=5 // pred_check
      %p91 = pneg %p90
    $region14: #{spatial_pyramid_pooling.1} parent=5 // pred_check_branch
      %93 = sbr.rel (%p91) target = $region16
    $region15: #{spatial_pyramid_pooling.1} parent=5 // pred_region
      // Predicated region
      $region17: #{spatial_pyramid_pooling.1} parent=15 // pred_check
        %p94 = pneg %p41
      $region18: #{spatial_pyramid_pooling.1} parent=15 // pred_check_branch
        %96 = sbr.rel (%p94) target = $region20
      $region19: #{spatial_pyramid_pooling.1} parent=15 // pred_region
        %p97 = scmp.lt.s32.totalorder %s14, 1
        %s98 = scalar_select %p97, %s14, 1
        %p99 = scmp.lt.s32.totalorder %s15, 0
        %s100 = scalar_select %p99, %s15, 0
        %s101 = smul.addr %s98, 32
        %s102 = sadd.s32 %s100, %s101
        %s103 = smul.addr %s102, 8
        %s104 = scalar_lea.vmem %s0, %s103
      $region20: #{spatial_pyramid_pooling.1} parent=15 // pred_fallthru
        _
    $region16: #{spatial_pyramid_pooling.1} parent=5 // pred_fallthru
      _
    %p105 = scmp.le.s32.totalorder 1, %s7
    %p106 = scmp.lt.s32.totalorder %s7, 3
    %p107 = pnand %p105, %p106
    %p108 = pneg %p107
    // Predicated region
    $region21: #{spatial_pyramid_pooling.1} parent=5 // pred_check
      _
    $region22: #{spatial_pyramid_pooling.1} parent=5 // pred_check_branch
      %110 = sbr.rel (%p107) target = $region24
    $region23: #{spatial_pyramid_pooling.1} parent=5 // pred_region
      %s111 = ssub.s32 %s7, 1
      %p112 = scmp.lt.s32.totalorder %s16, 1
      %s113 = scalar_select %p112, %s16, 1
      %p114 = scmp.lt.s32.totalorder %s17, 0
      %s115 = scalar_select %p114, %s17, 0
      %s116 = smul.addr %s113, 32
      %s117 = sadd.s32 %s115, %s116
      %s118 = smul.addr %s117, 8
      %s119 = scalar_lea.vmem %s0, %s118
      %p120 = pneg %p47
      %p121 = pneg %p44
      %p122 = pneg %p75
      %p123 = pneg %p72
      %p124 = scmp.lt.s32.totalorder %s16, 1
      %s125 = scalar_select %p124, %s16, 1
      %p126 = scmp.lt.s32.totalorder %s17, 0
      %s127 = scalar_select %p126, %s17, 0
      %s128 = smul.addr %s125, 128
      %s129 = sadd.s32 %s127, %s128
      %s130 = smul.addr %s129, 8
      %s131 = scalar_lea.vmem %s1, %s130
      %p132 = scmp.lt.s32.totalorder %s16, 1
      %s133 = scalar_select %p132, %s16, 1
      %p134 = scmp.lt.s32.totalorder %s17, 0
      %s135 = scalar_select %p134, %s17, 0
      %s136 = smul.addr %s133, 32
      %s137 = sadd.s32 %s135, %s136
      %s138 = smul.addr %s137, 8
      %s139 = scalar_lea.vmem %s0, %s138
      %p140 = scmp.lt.s32.totalorder %s16, 1
      %s141 = scalar_select %p140, %s16, 1
      %p142 = scmp.lt.s32.totalorder %s17, 0
      %s143 = scalar_select %p142, %s17, 0
      %s144 = smul.addr %s141, 128
      %s145 = sadd.s32 %s143, %s144
      %s146 = smul.addr %s145, 8
      %s147 = scalar_lea.vmem %s1, %s146
      %v148 = vld [vmem:[%s139] sm:$0xff]
      %v149 = vld [vmem:[%s139 + $0x8] sm:$0xff]
      %v150 = vld [vmem:[%s139 + $0x10] sm:$0xff]
      %v151 = vld [vmem:[%s139 + $0x18] sm:$0xff]
      %v152 = vld [vmem:[%s139 + $0x20] sm:$0xff]
      %v153 = vld [vmem:[%s139 + $0x28] sm:$0xff]
      %v154 = vld [vmem:[%s139 + $0x30] sm:$0xff]
      %v155 = vld [vmem:[%s139 + $0x38] sm:$0xff]
      %v156 = vld [vmem:[%s139 + $0x40] sm:$0xff]
      %v157 = vld [vmem:[%s139 + $0x48] sm:$0xff]
      %v158 = vld [vmem:[%s139 + $0x50] sm:$0xff]
      %v159 = vld [vmem:[%s139 + $0x58] sm:$0xff]
      %v160 = vld [vmem:[%s139 + $0x60] sm:$0xff]
      %v161 = vld [vmem:[%s139 + $0x68] sm:$0xff]
      %v162 = vld [vmem:[%s139 + $0x70] sm:$0xff]
      %v163 = vld [vmem:[%s139 + $0x78] sm:$0xff]
      %v164 = vld [vmem:[%s139 + $0x80] sm:$0xff]
      %v165 = vld [vmem:[%s139 + $0x88] sm:$0xff]
      %v166 = vld [vmem:[%s139 + $0x90] sm:$0xff]
      %v167 = vld [vmem:[%s139 + $0x98] sm:$0xff]
      %v168 = vld [vmem:[%s139 + $0xa0] sm:$0xff]
      %v169 = vld [vmem:[%s139 + $0xa8] sm:$0xff]
      %v170 = vld [vmem:[%s139 + $0xb0] sm:$0xff]
      %v171 = vld [vmem:[%s139 + $0xb8] sm:$0xff]
      %v172 = vld [vmem:[%s139 + $0xc0] sm:$0xff]
      %v173 = vld [vmem:[%s139 + $0xc8] sm:$0xff]
      %v174 = vld [vmem:[%s139 + $0xd0] sm:$0xff]
      %v175 = vld [vmem:[%s139 + $0xd8] sm:$0xff]
      %v176 = vld [vmem:[%s139 + $0xe0] sm:$0xff]
      %v177 = vld [vmem:[%s139 + $0xe8] sm:$0xff]
      %v178 = vld [vmem:[%s139 + $0xf0] sm:$0xff]
      %v179 = vld [vmem:[%s139 + $0xf8] sm:$0xff]
      %s180 = scalar_lea.vmem %s147, 768
      %vm181 = vcmask 31744
      %182 = vst.msk [vmem:[%s180] sm:$0xff] %vm181, %v148
      %183 = vst.msk [vmem:[%s180 + $0x8] sm:$0xff] %vm181, %v149
      %184 = vst.msk [vmem:[%s180 + $0x10] sm:$0xff] %vm181, %v150
      %185 = vst.msk [vmem:[%s180 + $0x18] sm:$0xff] %vm181, %v151
      %186 = vst.msk [vmem:[%s180 + $0x20] sm:$0xff] %vm181, %v152
      %187 = vst.msk [vmem:[%s180 + $0x28] sm:$0xff] %vm181, %v153
      %188 = vst.msk [vmem:[%s180 + $0x30] sm:$0xff] %vm181, %v154
      %189 = vst.msk [vmem:[%s180 + $0x38] sm:$0xff] %vm181, %v155
      %190 = vst.msk [vmem:[%s180 + $0x40] sm:$0xff] %vm181, %v156
      %191 = vst.msk [vmem:[%s180 + $0x48] sm:$0xff] %vm181, %v157
      %192 = vst.msk [vmem:[%s180 + $0x50] sm:$0xff] %vm181, %v158
      %193 = vst.msk [vmem:[%s180 + $0x58] sm:$0xff] %vm181, %v159
      %194 = vst.msk [vmem:[%s180 + $0x60] sm:$0xff] %vm181, %v160
      %195 = vst.msk [vmem:[%s180 + $0x68] sm:$0xff] %vm181, %v161
      %196 = vst.msk [vmem:[%s180 + $0x70] sm:$0xff] %vm181, %v162
      %197 = vst.msk [vmem:[%s180 + $0x78] sm:$0xff] %vm181, %v163
      %198 = vst.msk [vmem:[%s180 + $0x80] sm:$0xff] %vm181, %v164
      %199 = vst.msk [vmem:[%s180 + $0x88] sm:$0xff] %vm181, %v165
      %200 = vst.msk [vmem:[%s180 + $0x90] sm:$0xff] %vm181, %v166
      %201 = vst.msk [vmem:[%s180 + $0x98] sm:$0xff] %vm181, %v167
      %202 = vst.msk [vmem:[%s180 + $0xa0] sm:$0xff] %vm181, %v168
      %203 = vst.msk [vmem:[%s180 + $0xa8] sm:$0xff] %vm181, %v169
      %204 = vst.msk [vmem:[%s180 + $0xb0] sm:$0xff] %vm181, %v170
      %205 = vst.msk [vmem:[%s180 + $0xb8] sm:$0xff] %vm181, %v171
      %206 = vst.msk [vmem:[%s180 + $0xc0] sm:$0xff] %vm181, %v172
      %207 = vst.msk [vmem:[%s180 + $0xc8] sm:$0xff] %vm181, %v173
      %208 = vst.msk [vmem:[%s180 + $0xd0] sm:$0xff] %vm181, %v174
      %209 = vst.msk [vmem:[%s180 + $0xd8] sm:$0xff] %vm181, %v175
      %210 = vst.msk [vmem:[%s180 + $0xe0] sm:$0xff] %vm181, %v176
      %211 = vst.msk [vmem:[%s180 + $0xe8] sm:$0xff] %vm181, %v177
      %212 = vst.msk [vmem:[%s180 + $0xf0] sm:$0xff] %vm181, %v178
      %213 = vst.msk [vmem:[%s180 + $0xf8] sm:$0xff] %vm181, %v179
      %v214 = vmax.f32 %v148, %v150
      %v215 = vmax.f32 %v149, %v151
      %v216 = vmax.f32 %v150, %v152
      %v217 = vmax.f32 %v151, %v153
      %v218 = vmax.f32 %v152, %v154
      %v219 = vmax.f32 %v153, %v155
      %v220 = vmax.f32 %v154, %v156
      %v221 = vmax.f32 %v155, %v157
      %v222 = vmax.f32 %v156, %v158
      %v223 = vmax.f32 %v157, %v159
      %v224 = vmax.f32 %v158, %v160
      %v225 = vmax.f32 %v159, %v161
      %v226 = vmax.f32 %v160, %v162
      %v227 = vmax.f32 %v161, %v163
      %v228 = vmax.f32 %v162, %v164
      %v229 = vmax.f32 %v163, %v165
      %v230 = vmax.f32 %v164, %v166
      %v231 = vmax.f32 %v165, %v167
      %v232 = vmax.f32 %v166, %v168
      %v233 = vmax.f32 %v167, %v169
      %v234 = vmax.f32 %v168, %v170
      %v235 = vmax.f32 %v169, %v171
      %v236 = vmax.f32 %v170, %v172
      %v237 = vmax.f32 %v171, %v173
      %v238 = vmax.f32 %v172, %v174
      %v239 = vmax.f32 %v173, %v175
      %v240 = vmax.f32 %v174, %v176
      %v241 = vmax.f32 %v175, %v177
      %v242 = vmax.f32 %v214, %v152
      %v243 = vmax.f32 %v215, %v153
      %v244 = vmax.f32 %v216, %v154
      %v245 = vmax.f32 %v217, %v155
      %v246 = vmax.f32 %v218, %v156
      %v247 = vmax.f32 %v219, %v157
      %v248 = vmax.f32 %v220, %v158
      %v249 = vmax.f32 %v221, %v159
      %v250 = vmax.f32 %v222, %v160
      %v251 = vmax.f32 %v223, %v161
      %v252 = vmax.f32 %v224, %v162
      %v253 = vmax.f32 %v225, %v163
      %v254 = vmax.f32 %v226, %v164
      %v255 = vmax.f32 %v227, %v165
      %v256 = vmax.f32 %v228, %v166
      %v257 = vmax.f32 %v229, %v167
      %v258 = vmax.f32 %v230, %v168
      %v259 = vmax.f32 %v231, %v169
      %v260 = vmax.f32 %v232, %v170
      %v261 = vmax.f32 %v233, %v171
      %v262 = vmax.f32 %v234, %v172
      %v263 = vmax.f32 %v235, %v173
      %v264 = vmax.f32 %v236, %v174
      %v265 = vmax.f32 %v237, %v175
      %v266 = vmax.f32 %v238, %v176
      %v267 = vmax.f32 %v239, %v177
      %v268 = vmax.f32 %v240, %v178
      %v269 = vmax.f32 %v241, %v179
      %v270 = vmax.f32 %v242, %v154
      %v271 = vmax.f32 %v243, %v155
      %v272 = vmax.f32 %v244, %v156
      %v273 = vmax.f32 %v245, %v157
      %v274 = vmax.f32 %v246, %v158
      %v275 = vmax.f32 %v247, %v159
      %v276 = vmax.f32 %v248, %v160
      %v277 = vmax.f32 %v249, %v161
      %v278 = vmax.f32 %v250, %v162
      %v279 = vmax.f32 %v251, %v163
      %v280 = vmax.f32 %v252, %v164
      %v281 = vmax.f32 %v253, %v165
      %v282 = vmax.f32 %v254, %v166
      %v283 = vmax.f32 %v255, %v167
      %v284 = vmax.f32 %v256, %v168
      %v285 = vmax.f32 %v257, %v169
      %v286 = vmax.f32 %v258, %v170
      %v287 = vmax.f32 %v259, %v171
      %v288 = vmax.f32 %v260, %v172
      %v289 = vmax.f32 %v261, %v173
      %v290 = vmax.f32 %v262, %v174
      %v291 = vmax.f32 %v263, %v175
      %v292 = vmax.f32 %v264, %v176
      %v293 = vmax.f32 %v265, %v177
      %v294 = vmax.f32 %v266, %v178
      %v295 = vmax.f32 %v267, %v179
      %v296 = vmax.f32 %v270, %v156
      %v297 = vmax.f32 %v271, %v157
      %v298 = vmax.f32 %v272, %v158
      %v299 = vmax.f32 %v273, %v159
      %v300 = vmax.f32 %v274, %v160
      %v301 = vmax.f32 %v275, %v161
      %v302 = vmax.f32 %v276, %v162
      %v303 = vmax.f32 %v277, %v163
      %v304 = vmax.f32 %v278, %v164
      %v305 = vmax.f32 %v279, %v165
      %v306 = vmax.f32 %v280, %v166
      %v307 = vmax.f32 %v281, %v167
      %v308 = vmax.f32 %v282, %v168
      %v309 = vmax.f32 %v283, %v169
      %v310 = vmax.f32 %v284, %v170
      %v311 = vmax.f32 %v285, %v171
      %v312 = vmax.f32 %v286, %v172
      %v313 = vmax.f32 %v287, %v173
      %v314 = vmax.f32 %v288, %v174
      %v315 = vmax.f32 %v289, %v175
      %v316 = vmax.f32 %v290, %v176
      %v317 = vmax.f32 %v291, %v177
      %v318 = vmax.f32 %v292, %v178
      %v319 = vmax.f32 %v293, %v179
      %vm352 = vcmask 1041408
      %v353 = vrot.slane %v242, 6
      %v354 = vrot.slane %v243, 6
      %v355 = vsel %vm352, %v353, %v354
      %v356 = vrot.slane %v270, 6
      %v357 = vrot.slane %v271, 6
      %v358 = vsel %vm352, %v356, %v357
      %v359 = vrot.slane %v296, 6
      %v360 = vrot.slane %v297, 6
      %v361 = vsel %vm352, %v359, %v360
      %v362 = vrot.slane %v298, 6
      %v363 = vrot.slane %v299, 6
      %v364 = vsel %vm352, %v362, %v363
      %v365 = vrot.slane %v300, 6
      %v366 = vrot.slane %v301, 6
      %v367 = vsel %vm352, %v365, %v366
      %v368 = vrot.slane %v302, 6
      %v369 = vrot.slane %v303, 6
      %v370 = vsel %vm352, %v368, %v369
      %v371 = vrot.slane %v304, 6
      %v372 = vrot.slane %v305, 6
      %v373 = vsel %vm352, %v371, %v372
      %v374 = vrot.slane %v306, 6
      %v375 = vrot.slane %v307, 6
      %v376 = vsel %vm352, %v374, %v375
      %v377 = vrot.slane %v308, 6
      %v378 = vrot.slane %v309, 6
      %v379 = vsel %vm352, %v377, %v378
      %v380 = vrot.slane %v310, 6
      %v381 = vrot.slane %v311, 6
      %v382 = vsel %vm352, %v380, %v381
      %v383 = vrot.slane %v312, 6
      %v384 = vrot.slane %v313, 6
      %v385 = vsel %vm352, %v383, %v384
      %v386 = vrot.slane %v314, 6
      %v387 = vrot.slane %v315, 6
      %v388 = vsel %vm352, %v386, %v387
      %v389 = vrot.slane %v316, 6
      %v390 = vrot.slane %v317, 6
      %v391 = vsel %vm352, %v389, %v390
      %v392 = vrot.slane %v318, 6
      %v393 = vrot.slane %v319, 6
      %v394 = vsel %vm352, %v392, %v393
      %v395 = vrot.slane %v294, 6
      %v396 = vrot.slane %v295, 6
      %v397 = vsel %vm352, %v395, %v396
      %v398 = vrot.slane %v268, 6
      %v399 = vrot.slane %v269, 6
      %v400 = vsel %vm352, %v398, %v399
      %v449 = vsel %vm352, -inf, %v353
      %v450 = vsel %vm352, -inf, %v356
      %v451 = vsel %vm352, -inf, %v359
      %v452 = vsel %vm352, -inf, %v362
      %v453 = vsel %vm352, -inf, %v365
      %v454 = vsel %vm352, -inf, %v368
      %v455 = vsel %vm352, -inf, %v371
      %v456 = vsel %vm352, -inf, %v374
      %v457 = vsel %vm352, -inf, %v377
      %v458 = vsel %vm352, -inf, %v380
      %v459 = vsel %vm352, -inf, %v383
      %v460 = vsel %vm352, -inf, %v386
      %v461 = vsel %vm352, -inf, %v389
      %v462 = vsel %vm352, -inf, %v392
      %v463 = vsel %vm352, -inf, %v395
      %v464 = vsel %vm352, -inf, %v398
      %v465 = vsel %vm352, %v354, -inf
      %v466 = vsel %vm352, %v357, -inf
      %v467 = vsel %vm352, %v360, -inf
      %v468 = vsel %vm352, %v363, -inf
      %v469 = vsel %vm352, %v366, -inf
      %v470 = vsel %vm352, %v369, -inf
      %v471 = vsel %vm352, %v372, -inf
      %v472 = vsel %vm352, %v375, -inf
      %v473 = vsel %vm352, %v378, -inf
      %v474 = vsel %vm352, %v381, -inf
      %v475 = vsel %vm352, %v384, -inf
      %v476 = vsel %vm352, %v387, -inf
      %v477 = vsel %vm352, %v390, -inf
      %v478 = vsel %vm352, %v393, -inf
      %v479 = vsel %vm352, %v396, -inf
      %v480 = vsel %vm352, %v399, -inf
      %vm513 = vcmask 1046528
      %v514 = vrot.slane %v449, 1
      %v515 = vrot.slane %v355, 1
      %v516 = vsel %vm513, %v514, %v515
      %v517 = vrot.slane %v465, 1
      %v518 = vsel %vm513, %v515, %v517
      %v519 = vrot.slane %v450, 1
      %v520 = vrot.slane %v358, 1
      %v521 = vsel %vm513, %v519, %v520
      %v522 = vrot.slane %v466, 1
      %v523 = vsel %vm513, %v520, %v522
      %v524 = vrot.slane %v451, 1
      %v525 = vrot.slane %v361, 1
      %v526 = vsel %vm513, %v524, %v525
      %v527 = vrot.slane %v467, 1
      %v528 = vsel %vm513, %v525, %v527
      %v529 = vrot.slane %v452, 1
      %v530 = vrot.slane %v364, 1
      %v531 = vsel %vm513, %v529, %v530
      %v532 = vrot.slane %v468, 1
      %v533 = vsel %vm513, %v530, %v532
      %v534 = vrot.slane %v453, 1
      %v535 = vrot.slane %v367, 1
      %v536 = vsel %vm513, %v534, %v535
      %v537 = vrot.slane %v469, 1
      %v538 = vsel %vm513, %v535, %v537
      %v539 = vrot.slane %v454, 1
      %v540 = vrot.slane %v370, 1
      %v541 = vsel %vm513, %v539, %v540
      %v542 = vrot.slane %v470, 1
      %v543 = vsel %vm513, %v540, %v542
      %v544 = vrot.slane %v455, 1
      %v545 = vrot.slane %v373, 1
      %v546 = vsel %vm513, %v544, %v545
      %v547 = vrot.slane %v471, 1
      %v548 = vsel %vm513, %v545, %v547
      %v549 = vrot.slane %v456, 1
      %v550 = vrot.slane %v376, 1
      %v551 = vsel %vm513, %v549, %v550
      %v552 = vrot.slane %v472, 1
      %v553 = vsel %vm513, %v550, %v552
      %v554 = vrot.slane %v457, 1
      %v555 = vrot.slane %v379, 1
      %v556 = vsel %vm513, %v554, %v555
      %v557 = vrot.slane %v473, 1
      %v558 = vsel %vm513, %v555, %v557
      %v559 = vrot.slane %v458, 1
      %v560 = vrot.slane %v382, 1
      %v561 = vsel %vm513, %v559, %v560
      %v562 = vrot.slane %v474, 1
      %v563 = vsel %vm513, %v560, %v562
      %v564 = vrot.slane %v459, 1
      %v565 = vrot.slane %v385, 1
      %v566 = vsel %vm513, %v564, %v565
      %v567 = vrot.slane %v475, 1
      %v568 = vsel %vm513, %v565, %v567
      %v569 = vrot.slane %v460, 1
      %v570 = vrot.slane %v388, 1
      %v571 = vsel %vm513, %v569, %v570
      %v572 = vrot.slane %v476, 1
      %v573 = vsel %vm513, %v570, %v572
      %v574 = vrot.slane %v461, 1
      %v575 = vrot.slane %v391, 1
      %v576 = vsel %vm513, %v574, %v575
      %v577 = vrot.slane %v477, 1
      %v578 = vsel %vm513, %v575, %v577
      %v579 = vrot.slane %v462, 1
      %v580 = vrot.slane %v394, 1
      %v581 = vsel %vm513, %v579, %v580
      %v582 = vrot.slane %v478, 1
      %v583 = vsel %vm513, %v580, %v582
      %v584 = vrot.slane %v463, 1
      %v585 = vrot.slane %v397, 1
      %v586 = vsel %vm513, %v584, %v585
      %v587 = vrot.slane %v479, 1
      %v588 = vsel %vm513, %v585, %v587
      %v589 = vrot.slane %v464, 1
      %v590 = vrot.slane %v400, 1
      %v591 = vsel %vm513, %v589, %v590
      %v592 = vrot.slane %v480, 1
      %v593 = vsel %vm513, %v590, %v592
      %v626 = vmax.f32 %v449, %v516
      %v627 = vmax.f32 %v355, %v518
      %v628 = vmax.f32 %v450, %v521
      %v629 = vmax.f32 %v358, %v523
      %v630 = vmax.f32 %v451, %v526
      %v631 = vmax.f32 %v361, %v528
      %v632 = vmax.f32 %v452, %v531
      %v633 = vmax.f32 %v364, %v533
      %v634 = vmax.f32 %v453, %v536
      %v635 = vmax.f32 %v367, %v538
      %v636 = vmax.f32 %v454, %v541
      %v637 = vmax.f32 %v370, %v543
      %v638 = vmax.f32 %v455, %v546
      %v639 = vmax.f32 %v373, %v548
      %v640 = vmax.f32 %v456, %v551
      %v641 = vmax.f32 %v376, %v553
      %v642 = vmax.f32 %v457, %v556
      %v643 = vmax.f32 %v379, %v558
      %v644 = vmax.f32 %v458, %v561
      %v645 = vmax.f32 %v382, %v563
      %v646 = vmax.f32 %v459, %v566
      %v647 = vmax.f32 %v385, %v568
      %v648 = vmax.f32 %v460, %v571
      %v649 = vmax.f32 %v388, %v573
      %v650 = vmax.f32 %v461, %v576
      %v651 = vmax.f32 %v391, %v578
      %v652 = vmax.f32 %v462, %v581
      %v653 = vmax.f32 %v394, %v583
      %v654 = vmax.f32 %v463, %v586
      %v655 = vmax.f32 %v397, %v588
      %v656 = vmax.f32 %v464, %v591
      %v657 = vmax.f32 %v400, %v593
      %vm658 = vcmask 1045504
      %v659 = vrot.slane %v449, 2
      %v660 = vrot.slane %v355, 2
      %v661 = vsel %vm658, %v659, %v660
      %v662 = vrot.slane %v465, 2
      %v663 = vsel %vm658, %v660, %v662
      %v664 = vrot.slane %v450, 2
      %v665 = vrot.slane %v358, 2
      %v666 = vsel %vm658, %v664, %v665
      %v667 = vrot.slane %v466, 2
      %v668 = vsel %vm658, %v665, %v667
      %v669 = vrot.slane %v451, 2
      %v670 = vrot.slane %v361, 2
      %v671 = vsel %vm658, %v669, %v670
      %v672 = vrot.slane %v467, 2
      %v673 = vsel %vm658, %v670, %v672
      %v674 = vrot.slane %v452, 2
      %v675 = vrot.slane %v364, 2
      %v676 = vsel %vm658, %v674, %v675
      %v677 = vrot.slane %v468, 2
      %v678 = vsel %vm658, %v675, %v677
      %v679 = vrot.slane %v453, 2
      %v680 = vrot.slane %v367, 2
      %v681 = vsel %vm658, %v679, %v680
      %v682 = vrot.slane %v469, 2
      %v683 = vsel %vm658, %v680, %v682
      %v684 = vrot.slane %v454, 2
      %v685 = vrot.slane %v370, 2
      %v686 = vsel %vm658, %v684, %v685
      %v687 = vrot.slane %v470, 2
      %v688 = vsel %vm658, %v685, %v687
      %v689 = vrot.slane %v455, 2
      %v690 = vrot.slane %v373, 2
      %v691 = vsel %vm658, %v689, %v690
      %v692 = vrot.slane %v471, 2
      %v693 = vsel %vm658, %v690, %v692
      %v694 = vrot.slane %v456, 2
      %v695 = vrot.slane %v376, 2
      %v696 = vsel %vm658, %v694, %v695
      %v697 = vrot.slane %v472, 2
      %v698 = vsel %vm658, %v695, %v697
      %v699 = vrot.slane %v457, 2
      %v700 = vrot.slane %v379, 2
      %v701 = vsel %vm658, %v699, %v700
      %v702 = vrot.slane %v473, 2
      %v703 = vsel %vm658, %v700, %v702
      %v704 = vrot.slane %v458, 2
      %v705 = vrot.slane %v382, 2
      %v706 = vsel %vm658, %v704, %v705
      %v707 = vrot.slane %v474, 2
      %v708 = vsel %vm658, %v705, %v707
      %v709 = vrot.slane %v459, 2
      %v710 = vrot.slane %v385, 2
      %v711 = vsel %vm658, %v709, %v710
      %v712 = vrot.slane %v475, 2
      %v713 = vsel %vm658, %v710, %v712
      %v714 = vrot.slane %v460, 2
      %v715 = vrot.slane %v388, 2
      %v716 = vsel %vm658, %v714, %v715
      %v717 = vrot.slane %v476, 2
      %v718 = vsel %vm658, %v715, %v717
      %v719 = vrot.slane %v461, 2
      %v720 = vrot.slane %v391, 2
      %v721 = vsel %vm658, %v719, %v720
      %v722 = vrot.slane %v477, 2
      %v723 = vsel %vm658, %v720, %v722
      %v724 = vrot.slane %v462, 2
      %v725 = vrot.slane %v394, 2
      %v726 = vsel %vm658, %v724, %v725
      %v727 = vrot.slane %v478, 2
      %v728 = vsel %vm658, %v725, %v727
      %v729 = vrot.slane %v463, 2
      %v730 = vrot.slane %v397, 2
      %v731 = vsel %vm658, %v729, %v730
      %v732 = vrot.slane %v479, 2
      %v733 = vsel %vm658, %v730, %v732
      %v734 = vrot.slane %v464, 2
      %v735 = vrot.slane %v400, 2
      %v736 = vsel %vm658, %v734, %v735
      %v737 = vrot.slane %v480, 2
      %v738 = vsel %vm658, %v735, %v737
      %v771 = vmax.f32 %v626, %v661
      %v772 = vmax.f32 %v627, %v663
      %v773 = vmax.f32 %v628, %v666
      %v774 = vmax.f32 %v629, %v668
      %v775 = vmax.f32 %v630, %v671
      %v776 = vmax.f32 %v631, %v673
      %v777 = vmax.f32 %v632, %v676
      %v778 = vmax.f32 %v633, %v678
      %v779 = vmax.f32 %v634, %v681
      %v780 = vmax.f32 %v635, %v683
      %v781 = vmax.f32 %v636, %v686
      %v782 = vmax.f32 %v637, %v688
      %v783 = vmax.f32 %v638, %v691
      %v784 = vmax.f32 %v639, %v693
      %v785 = vmax.f32 %v640, %v696
      %v786 = vmax.f32 %v641, %v698
      %v787 = vmax.f32 %v642, %v701
      %v788 = vmax.f32 %v643, %v703
      %v789 = vmax.f32 %v644, %v706
      %v790 = vmax.f32 %v645, %v708
      %v791 = vmax.f32 %v646, %v711
      %v792 = vmax.f32 %v647, %v713
      %v793 = vmax.f32 %v648, %v716
      %v794 = vmax.f32 %v649, %v718
      %v795 = vmax.f32 %v650, %v721
      %v796 = vmax.f32 %v651, %v723
      %v797 = vmax.f32 %v652, %v726
      %v798 = vmax.f32 %v653, %v728
      %v799 = vmax.f32 %v654, %v731
      %v800 = vmax.f32 %v655, %v733
      %v801 = vmax.f32 %v656, %v736
      %v802 = vmax.f32 %v657, %v738
      %vm803 = vcmask 1044480
      %v804 = vrot.slane %v449, 3
      %v805 = vrot.slane %v355, 3
      %v806 = vsel %vm803, %v804, %v805
      %v807 = vrot.slane %v465, 3
      %v808 = vsel %vm803, %v805, %v807
      %v809 = vrot.slane %v450, 3
      %v810 = vrot.slane %v358, 3
      %v811 = vsel %vm803, %v809, %v810
      %v812 = vrot.slane %v466, 3
      %v813 = vsel %vm803, %v810, %v812
      %v814 = vrot.slane %v451, 3
      %v815 = vrot.slane %v361, 3
      %v816 = vsel %vm803, %v814, %v815
      %v817 = vrot.slane %v467, 3
      %v818 = vsel %vm803, %v815, %v817
      %v819 = vrot.slane %v452, 3
      %v820 = vrot.slane %v364, 3
      %v821 = vsel %vm803, %v819, %v820
      %v822 = vrot.slane %v468, 3
      %v823 = vsel %vm803, %v820, %v822
      %v824 = vrot.slane %v453, 3
      %v825 = vrot.slane %v367, 3
      %v826 = vsel %vm803, %v824, %v825
      %v827 = vrot.slane %v469, 3
      %v828 = vsel %vm803, %v825, %v827
      %v829 = vrot.slane %v454, 3
      %v830 = vrot.slane %v370, 3
      %v831 = vsel %vm803, %v829, %v830
      %v832 = vrot.slane %v470, 3
      %v833 = vsel %vm803, %v830, %v832
      %v834 = vrot.slane %v455, 3
      %v835 = vrot.slane %v373, 3
      %v836 = vsel %vm803, %v834, %v835
      %v837 = vrot.slane %v471, 3
      %v838 = vsel %vm803, %v835, %v837
      %v839 = vrot.slane %v456, 3
      %v840 = vrot.slane %v376, 3
      %v841 = vsel %vm803, %v839, %v840
      %v842 = vrot.slane %v472, 3
      %v843 = vsel %vm803, %v840, %v842
      %v844 = vrot.slane %v457, 3
      %v845 = vrot.slane %v379, 3
      %v846 = vsel %vm803, %v844, %v845
      %v847 = vrot.slane %v473, 3
      %v848 = vsel %vm803, %v845, %v847
      %v849 = vrot.slane %v458, 3
      %v850 = vrot.slane %v382, 3
      %v851 = vsel %vm803, %v849, %v850
      %v852 = vrot.slane %v474, 3
      %v853 = vsel %vm803, %v850, %v852
      %v854 = vrot.slane %v459, 3
      %v855 = vrot.slane %v385, 3
      %v856 = vsel %vm803, %v854, %v855
      %v857 = vrot.slane %v475, 3
      %v858 = vsel %vm803, %v855, %v857
      %v859 = vrot.slane %v460, 3
      %v860 = vrot.slane %v388, 3
      %v861 = vsel %vm803, %v859, %v860
      %v862 = vrot.slane %v476, 3
      %v863 = vsel %vm803, %v860, %v862
      %v864 = vrot.slane %v461, 3
      %v865 = vrot.slane %v391, 3
      %v866 = vsel %vm803, %v864, %v865
      %v867 = vrot.slane %v477, 3
      %v868 = vsel %vm803, %v865, %v867
      %v869 = vrot.slane %v462, 3
      %v870 = vrot.slane %v394, 3
      %v871 = vsel %vm803, %v869, %v870
      %v872 = vrot.slane %v478, 3
      %v873 = vsel %vm803, %v870, %v872
      %v874 = vrot.slane %v463, 3
      %v875 = vrot.slane %v397, 3
      %v876 = vsel %vm803, %v874, %v875
      %v877 = vrot.slane %v479, 3
      %v878 = vsel %vm803, %v875, %v877
      %v879 = vrot.slane %v464, 3
      %v880 = vrot.slane %v400, 3
      %v881 = vsel %vm803, %v879, %v880
      %v882 = vrot.slane %v480, 3
      %v883 = vsel %vm803, %v880, %v882
      %v916 = vmax.f32 %v771, %v806
      %v917 = vmax.f32 %v772, %v808
      %v918 = vmax.f32 %v773, %v811
      %v919 = vmax.f32 %v774, %v813
      %v920 = vmax.f32 %v775, %v816
      %v921 = vmax.f32 %v776, %v818
      %v922 = vmax.f32 %v777, %v821
      %v923 = vmax.f32 %v778, %v823
      %v924 = vmax.f32 %v779, %v826
      %v925 = vmax.f32 %v780, %v828
      %v926 = vmax.f32 %v781, %v831
      %v927 = vmax.f32 %v782, %v833
      %v928 = vmax.f32 %v783, %v836
      %v929 = vmax.f32 %v784, %v838
      %v930 = vmax.f32 %v785, %v841
      %v931 = vmax.f32 %v786, %v843
      %v932 = vmax.f32 %v787, %v846
      %v933 = vmax.f32 %v788, %v848
      %v934 = vmax.f32 %v789, %v851
      %v935 = vmax.f32 %v790, %v853
      %v936 = vmax.f32 %v791, %v856
      %v937 = vmax.f32 %v792, %v858
      %v938 = vmax.f32 %v793, %v861
      %v939 = vmax.f32 %v794, %v863
      %v940 = vmax.f32 %v795, %v866
      %v941 = vmax.f32 %v796, %v868
      %v942 = vmax.f32 %v797, %v871
      %v943 = vmax.f32 %v798, %v873
      %v944 = vmax.f32 %v799, %v876
      %v945 = vmax.f32 %v800, %v878
      %v946 = vmax.f32 %v801, %v881
      %v947 = vmax.f32 %v802, %v883
      %vm948 = vcmask 1043456
      %v949 = vrot.slane %v449, 4
      %v950 = vrot.slane %v355, 4
      %v951 = vsel %vm948, %v949, %v950
      %v952 = vrot.slane %v465, 4
      %v953 = vsel %vm948, %v950, %v952
      %v954 = vrot.slane %v450, 4
      %v955 = vrot.slane %v358, 4
      %v956 = vsel %vm948, %v954, %v955
      %v957 = vrot.slane %v466, 4
      %v958 = vsel %vm948, %v955, %v957
      %v959 = vrot.slane %v451, 4
      %v960 = vrot.slane %v361, 4
      %v961 = vsel %vm948, %v959, %v960
      %v962 = vrot.slane %v467, 4
      %v963 = vsel %vm948, %v960, %v962
      %v964 = vrot.slane %v452, 4
      %v965 = vrot.slane %v364, 4
      %v966 = vsel %vm948, %v964, %v965
      %v967 = vrot.slane %v468, 4
      %v968 = vsel %vm948, %v965, %v967
      %v969 = vrot.slane %v453, 4
      %v970 = vrot.slane %v367, 4
      %v971 = vsel %vm948, %v969, %v970
      %v972 = vrot.slane %v469, 4
      %v973 = vsel %vm948, %v970, %v972
      %v974 = vrot.slane %v454, 4
      %v975 = vrot.slane %v370, 4
      %v976 = vsel %vm948, %v974, %v975
      %v977 = vrot.slane %v470, 4
      %v978 = vsel %vm948, %v975, %v977
      %v979 = vrot.slane %v455, 4
      %v980 = vrot.slane %v373, 4
      %v981 = vsel %vm948, %v979, %v980
      %v982 = vrot.slane %v471, 4
      %v983 = vsel %vm948, %v980, %v982
      %v984 = vrot.slane %v456, 4
      %v985 = vrot.slane %v376, 4
      %v986 = vsel %vm948, %v984, %v985
      %v987 = vrot.slane %v472, 4
      %v988 = vsel %vm948, %v985, %v987
      %v989 = vrot.slane %v457, 4
      %v990 = vrot.slane %v379, 4
      %v991 = vsel %vm948, %v989, %v990
      %v992 = vrot.slane %v473, 4
      %v993 = vsel %vm948, %v990, %v992
      %v994 = vrot.slane %v458, 4
      %v995 = vrot.slane %v382, 4
      %v996 = vsel %vm948, %v994, %v995
      %v997 = vrot.slane %v474, 4
      %v998 = vsel %vm948, %v995, %v997
      %v999 = vrot.slane %v459, 4
      %v1000 = vrot.slane %v385, 4
      %v1001 = vsel %vm948, %v999, %v1000
      %v1002 = vrot.slane %v475, 4
      %v1003 = vsel %vm948, %v1000, %v1002
      %v1004 = vrot.slane %v460, 4
      %v1005 = vrot.slane %v388, 4
      %v1006 = vsel %vm948, %v1004, %v1005
      %v1007 = vrot.slane %v476, 4
      %v1008 = vsel %vm948, %v1005, %v1007
      %v1009 = vrot.slane %v461, 4
      %v1010 = vrot.slane %v391, 4
      %v1011 = vsel %vm948, %v1009, %v1010
      %v1012 = vrot.slane %v477, 4
      %v1013 = vsel %vm948, %v1010, %v1012
      %v1014 = vrot.slane %v462, 4
      %v1015 = vrot.slane %v394, 4
      %v1016 = vsel %vm948, %v1014, %v1015
      %v1017 = vrot.slane %v478, 4
      %v1018 = vsel %vm948, %v1015, %v1017
      %v1019 = vrot.slane %v463, 4
      %v1020 = vrot.slane %v397, 4
      %v1021 = vsel %vm948, %v1019, %v1020
      %v1022 = vrot.slane %v479, 4
      %v1023 = vsel %vm948, %v1020, %v1022
      %v1024 = vrot.slane %v464, 4
      %v1025 = vrot.slane %v400, 4
      %v1026 = vsel %vm948, %v1024, %v1025
      %v1027 = vrot.slane %v480, 4
      %v1028 = vsel %vm948, %v1025, %v1027
      %v1061 = vmax.f32 %v916, %v951
      %v1062 = vmax.f32 %v917, %v953
      %v1063 = vmax.f32 %v918, %v956
      %v1064 = vmax.f32 %v919, %v958
      %v1065 = vmax.f32 %v920, %v961
      %v1066 = vmax.f32 %v921, %v963
      %v1067 = vmax.f32 %v922, %v966
      %v1068 = vmax.f32 %v923, %v968
      %v1069 = vmax.f32 %v924, %v971
      %v1070 = vmax.f32 %v925, %v973
      %v1071 = vmax.f32 %v926, %v976
      %v1072 = vmax.f32 %v927, %v978
      %v1073 = vmax.f32 %v928, %v981
      %v1074 = vmax.f32 %v929, %v983
      %v1075 = vmax.f32 %v930, %v986
      %v1076 = vmax.f32 %v931, %v988
      %v1077 = vmax.f32 %v932, %v991
      %v1078 = vmax.f32 %v933, %v993
      %v1079 = vmax.f32 %v934, %v996
      %v1080 = vmax.f32 %v935, %v998
      %v1081 = vmax.f32 %v936, %v1001
      %v1082 = vmax.f32 %v937, %v1003
      %v1083 = vmax.f32 %v938, %v1006
      %v1084 = vmax.f32 %v939, %v1008
      %v1085 = vmax.f32 %v940, %v1011
      %v1086 = vmax.f32 %v941, %v1013
      %v1087 = vmax.f32 %v942, %v1016
      %v1088 = vmax.f32 %v943, %v1018
      %v1089 = vmax.f32 %v944, %v1021
      %v1090 = vmax.f32 %v945, %v1023
      %v1091 = vmax.f32 %v946, %v1026
      %v1092 = vmax.f32 %v947, %v1028
      %s1093 = scalar_lea.vmem %s147, 512
      %1094 = vst.msk [vmem:[%s1093] sm:$0xff] %vm181, %v1061
      %1095 = vst.msk [vmem:[%s1093 + $0x8] sm:$0xff] %vm181, %v1062
      %1096 = vst.msk [vmem:[%s1093 + $0x10] sm:$0xff] %vm181, %v1063
      %1097 = vst.msk [vmem:[%s1093 + $0x18] sm:$0xff] %vm181, %v1064
      %1098 = vst.msk [vmem:[%s1093 + $0x20] sm:$0xff] %vm181, %v1065
      %1099 = vst.msk [vmem:[%s1093 + $0x28] sm:$0xff] %vm181, %v1066
      %1100 = vst.msk [vmem:[%s1093 + $0x30] sm:$0xff] %vm181, %v1067
      %1101 = vst.msk [vmem:[%s1093 + $0x38] sm:$0xff] %vm181, %v1068
      %1102 = vst.msk [vmem:[%s1093 + $0x40] sm:$0xff] %vm181, %v1069
      %1103 = vst.msk [vmem:[%s1093 + $0x48] sm:$0xff] %vm181, %v1070
      %1104 = vst.msk [vmem:[%s1093 + $0x50] sm:$0xff] %vm181, %v1071
      %1105 = vst.msk [vmem:[%s1093 + $0x58] sm:$0xff] %vm181, %v1072
      %1106 = vst.msk [vmem:[%s1093 + $0x60] sm:$0xff] %vm181, %v1073
      %1107 = vst.msk [vmem:[%s1093 + $0x68] sm:$0xff] %vm181, %v1074
      %1108 = vst.msk [vmem:[%s1093 + $0x70] sm:$0xff] %vm181, %v1075
      %1109 = vst.msk [vmem:[%s1093 + $0x78] sm:$0xff] %vm181, %v1076
      %1110 = vst.msk [vmem:[%s1093 + $0x80] sm:$0xff] %vm181, %v1077
      %1111 = vst.msk [vmem:[%s1093 + $0x88] sm:$0xff] %vm181, %v1078
      %1112 = vst.msk [vmem:[%s1093 + $0x90] sm:$0xff] %vm181, %v1079
      %1113 = vst.msk [vmem:[%s1093 + $0x98] sm:$0xff] %vm181, %v1080
      %1114 = vst.msk [vmem:[%s1093 + $0xa0] sm:$0xff] %vm181, %v1081
      %1115 = vst.msk [vmem:[%s1093 + $0xa8] sm:$0xff] %vm181, %v1082
      %1116 = vst.msk [vmem:[%s1093 + $0xb0] sm:$0xff] %vm181, %v1083
      %1117 = vst.msk [vmem:[%s1093 + $0xb8] sm:$0xff] %vm181, %v1084
      %1118 = vst.msk [vmem:[%s1093 + $0xc0] sm:$0xff] %vm181, %v1085
      %1119 = vst.msk [vmem:[%s1093 + $0xc8] sm:$0xff] %vm181, %v1086
      %1120 = vst.msk [vmem:[%s1093 + $0xd0] sm:$0xff] %vm181, %v1087
      %1121 = vst.msk [vmem:[%s1093 + $0xd8] sm:$0xff] %vm181, %v1088
      %1122 = vst.msk [vmem:[%s1093 + $0xe0] sm:$0xff] %vm181, %v1089
      %1123 = vst.msk [vmem:[%s1093 + $0xe8] sm:$0xff] %vm181, %v1090
      %1124 = vst.msk [vmem:[%s1093 + $0xf0] sm:$0xff] %vm181, %v1091
      %1125 = vst.msk [vmem:[%s1093 + $0xf8] sm:$0xff] %vm181, %v1092
      %v1126 = vmax.f32 %v1061, %v1063
      %v1127 = vmax.f32 %v1062, %v1064
      %v1128 = vmax.f32 %v1063, %v1065
      %v1129 = vmax.f32 %v1064, %v1066
      %v1130 = vmax.f32 %v1065, %v1067
      %v1131 = vmax.f32 %v1066, %v1068
      %v1132 = vmax.f32 %v1067, %v1069
      %v1133 = vmax.f32 %v1068, %v1070
      %v1134 = vmax.f32 %v1069, %v1071
      %v1135 = vmax.f32 %v1070, %v1072
      %v1136 = vmax.f32 %v1071, %v1073
      %v1137 = vmax.f32 %v1072, %v1074
      %v1138 = vmax.f32 %v1073, %v1075
      %v1139 = vmax.f32 %v1074, %v1076
      %v1140 = vmax.f32 %v1075, %v1077
      %v1141 = vmax.f32 %v1076, %v1078
      %v1142 = vmax.f32 %v1077, %v1079
      %v1143 = vmax.f32 %v1078, %v1080
      %v1144 = vmax.f32 %v1079, %v1081
      %v1145 = vmax.f32 %v1080, %v1082
      %v1146 = vmax.f32 %v1081, %v1083
      %v1147 = vmax.f32 %v1082, %v1084
      %v1148 = vmax.f32 %v1083, %v1085
      %v1149 = vmax.f32 %v1084, %v1086
      %v1150 = vmax.f32 %v1085, %v1087
      %v1151 = vmax.f32 %v1086, %v1088
      %v1152 = vmax.f32 %v1087, %v1089
      %v1153 = vmax.f32 %v1088, %v1090
      %v1154 = vmax.f32 %v1126, %v1065
      %v1155 = vmax.f32 %v1127, %v1066
      %v1156 = vmax.f32 %v1128, %v1067
      %v1157 = vmax.f32 %v1129, %v1068
      %v1158 = vmax.f32 %v1130, %v1069
      %v1159 = vmax.f32 %v1131, %v1070
      %v1160 = vmax.f32 %v1132, %v1071
      %v1161 = vmax.f32 %v1133, %v1072
      %v1162 = vmax.f32 %v1134, %v1073
      %v1163 = vmax.f32 %v1135, %v1074
      %v1164 = vmax.f32 %v1136, %v1075
      %v1165 = vmax.f32 %v1137, %v1076
      %v1166 = vmax.f32 %v1138, %v1077
      %v1167 = vmax.f32 %v1139, %v1078
      %v1168 = vmax.f32 %v1140, %v1079
      %v1169 = vmax.f32 %v1141, %v1080
      %v1170 = vmax.f32 %v1142, %v1081
      %v1171 = vmax.f32 %v1143, %v1082
      %v1172 = vmax.f32 %v1144, %v1083
      %v1173 = vmax.f32 %v1145, %v1084
      %v1174 = vmax.f32 %v1146, %v1085
      %v1175 = vmax.f32 %v1147, %v1086
      %v1176 = vmax.f32 %v1148, %v1087
      %v1177 = vmax.f32 %v1149, %v1088
      %v1178 = vmax.f32 %v1150, %v1089
      %v1179 = vmax.f32 %v1151, %v1090
      %v1180 = vmax.f32 %v1152, %v1091
      %v1181 = vmax.f32 %v1153, %v1092
      %v1182 = vmax.f32 %v1154, %v1067
      %v1183 = vmax.f32 %v1155, %v1068
      %v1184 = vmax.f32 %v1156, %v1069
      %v1185 = vmax.f32 %v1157, %v1070
      %v1186 = vmax.f32 %v1158, %v1071
      %v1187 = vmax.f32 %v1159, %v1072
      %v1188 = vmax.f32 %v1160, %v1073
      %v1189 = vmax.f32 %v1161, %v1074
      %v1190 = vmax.f32 %v1162, %v1075
      %v1191 = vmax.f32 %v1163, %v1076
      %v1192 = vmax.f32 %v1164, %v1077
      %v1193 = vmax.f32 %v1165, %v1078
      %v1194 = vmax.f32 %v1166, %v1079
      %v1195 = vmax.f32 %v1167, %v1080
      %v1196 = vmax.f32 %v1168, %v1081
      %v1197 = vmax.f32 %v1169, %v1082
      %v1198 = vmax.f32 %v1170, %v1083
      %v1199 = vmax.f32 %v1171, %v1084
      %v1200 = vmax.f32 %v1172, %v1085
      %v1201 = vmax.f32 %v1173, %v1086
      %v1202 = vmax.f32 %v1174, %v1087
      %v1203 = vmax.f32 %v1175, %v1088
      %v1204 = vmax.f32 %v1176, %v1089
      %v1205 = vmax.f32 %v1177, %v1090
      %v1206 = vmax.f32 %v1178, %v1091
      %v1207 = vmax.f32 %v1179, %v1092
      %v1208 = vmax.f32 %v1182, %v1069
      %v1209 = vmax.f32 %v1183, %v1070
      %v1210 = vmax.f32 %v1184, %v1071
      %v1211 = vmax.f32 %v1185, %v1072
      %v1212 = vmax.f32 %v1186, %v1073
      %v1213 = vmax.f32 %v1187, %v1074
      %v1214 = vmax.f32 %v1188, %v1075
      %v1215 = vmax.f32 %v1189, %v1076
      %v1216 = vmax.f32 %v1190, %v1077
      %v1217 = vmax.f32 %v1191, %v1078
      %v1218 = vmax.f32 %v1192, %v1079
      %v1219 = vmax.f32 %v1193, %v1080
      %v1220 = vmax.f32 %v1194, %v1081
      %v1221 = vmax.f32 %v1195, %v1082
      %v1222 = vmax.f32 %v1196, %v1083
      %v1223 = vmax.f32 %v1197, %v1084
      %v1224 = vmax.f32 %v1198, %v1085
      %v1225 = vmax.f32 %v1199, %v1086
      %v1226 = vmax.f32 %v1200, %v1087
      %v1227 = vmax.f32 %v1201, %v1088
      %v1228 = vmax.f32 %v1202, %v1089
      %v1229 = vmax.f32 %v1203, %v1090
      %v1230 = vmax.f32 %v1204, %v1091
      %v1231 = vmax.f32 %v1205, %v1092
      %v1264 = vrot.slane %v1154, 6
      %v1265 = vrot.slane %v1155, 6
      %v1266 = vsel %vm352, %v1264, %v1265
      %v1267 = vrot.slane %v1182, 6
      %v1268 = vrot.slane %v1183, 6
      %v1269 = vsel %vm352, %v1267, %v1268
      %v1270 = vrot.slane %v1208, 6
      %v1271 = vrot.slane %v1209, 6
      %v1272 = vsel %vm352, %v1270, %v1271
      %v1273 = vrot.slane %v1210, 6
      %v1274 = vrot.slane %v1211, 6
      %v1275 = vsel %vm352, %v1273, %v1274
      %v1276 = vrot.slane %v1212, 6
      %v1277 = vrot.slane %v1213, 6
      %v1278 = vsel %vm352, %v1276, %v1277
      %v1279 = vrot.slane %v1214, 6
      %v1280 = vrot.slane %v1215, 6
      %v1281 = vsel %vm352, %v1279, %v1280
      %v1282 = vrot.slane %v1216, 6
      %v1283 = vrot.slane %v1217, 6
      %v1284 = vsel %vm352, %v1282, %v1283
      %v1285 = vrot.slane %v1218, 6
      %v1286 = vrot.slane %v1219, 6
      %v1287 = vsel %vm352, %v1285, %v1286
      %v1288 = vrot.slane %v1220, 6
      %v1289 = vrot.slane %v1221, 6
      %v1290 = vsel %vm352, %v1288, %v1289
      %v1291 = vrot.slane %v1222, 6
      %v1292 = vrot.slane %v1223, 6
      %v1293 = vsel %vm352, %v1291, %v1292
      %v1294 = vrot.slane %v1224, 6
      %v1295 = vrot.slane %v1225, 6
      %v1296 = vsel %vm352, %v1294, %v1295
      %v1297 = vrot.slane %v1226, 6
      %v1298 = vrot.slane %v1227, 6
      %v1299 = vsel %vm352, %v1297, %v1298
      %v1300 = vrot.slane %v1228, 6
      %v1301 = vrot.slane %v1229, 6
      %v1302 = vsel %vm352, %v1300, %v1301
      %v1303 = vrot.slane %v1230, 6
      %v1304 = vrot.slane %v1231, 6
      %v1305 = vsel %vm352, %v1303, %v1304
      %v1306 = vrot.slane %v1206, 6
      %v1307 = vrot.slane %v1207, 6
      %v1308 = vsel %vm352, %v1306, %v1307
      %v1309 = vrot.slane %v1180, 6
      %v1310 = vrot.slane %v1181, 6
      %v1311 = vsel %vm352, %v1309, %v1310
      %v1360 = vsel %vm352, -inf, %v1264
      %v1361 = vsel %vm352, -inf, %v1267
      %v1362 = vsel %vm352, -inf, %v1270
      %v1363 = vsel %vm352, -inf, %v1273
      %v1364 = vsel %vm352, -inf, %v1276
      %v1365 = vsel %vm352, -inf, %v1279
      %v1366 = vsel %vm352, -inf, %v1282
      %v1367 = vsel %vm352, -inf, %v1285
      %v1368 = vsel %vm352, -inf, %v1288
      %v1369 = vsel %vm352, -inf, %v1291
      %v1370 = vsel %vm352, -inf, %v1294
      %v1371 = vsel %vm352, -inf, %v1297
      %v1372 = vsel %vm352, -inf, %v1300
      %v1373 = vsel %vm352, -inf, %v1303
      %v1374 = vsel %vm352, -inf, %v1306
      %v1375 = vsel %vm352, -inf, %v1309
      %v1376 = vsel %vm352, %v1265, -inf
      %v1377 = vsel %vm352, %v1268, -inf
      %v1378 = vsel %vm352, %v1271, -inf
      %v1379 = vsel %vm352, %v1274, -inf
      %v1380 = vsel %vm352, %v1277, -inf
      %v1381 = vsel %vm352, %v1280, -inf
      %v1382 = vsel %vm352, %v1283, -inf
      %v1383 = vsel %vm352, %v1286, -inf
      %v1384 = vsel %vm352, %v1289, -inf
      %v1385 = vsel %vm352, %v1292, -inf
      %v1386 = vsel %vm352, %v1295, -inf
      %v1387 = vsel %vm352, %v1298, -inf
      %v1388 = vsel %vm352, %v1301, -inf
      %v1389 = vsel %vm352, %v1304, -inf
      %v1390 = vsel %vm352, %v1307, -inf
      %v1391 = vsel %vm352, %v1310, -inf
      %v1424 = vrot.slane %v1360, 1
      %v1425 = vrot.slane %v1266, 1
      %v1426 = vsel %vm513, %v1424, %v1425
      %v1427 = vrot.slane %v1376, 1
      %v1428 = vsel %vm513, %v1425, %v1427
      %v1429 = vrot.slane %v1361, 1
      %v1430 = vrot.slane %v1269, 1
      %v1431 = vsel %vm513, %v1429, %v1430
      %v1432 = vrot.slane %v1377, 1
      %v1433 = vsel %vm513, %v1430, %v1432
      %v1434 = vrot.slane %v1362, 1
      %v1435 = vrot.slane %v1272, 1
      %v1436 = vsel %vm513, %v1434, %v1435
      %v1437 = vrot.slane %v1378, 1
      %v1438 = vsel %vm513, %v1435, %v1437
      %v1439 = vrot.slane %v1363, 1
      %v1440 = vrot.slane %v1275, 1
      %v1441 = vsel %vm513, %v1439, %v1440
      %v1442 = vrot.slane %v1379, 1
      %v1443 = vsel %vm513, %v1440, %v1442
      %v1444 = vrot.slane %v1364, 1
      %v1445 = vrot.slane %v1278, 1
      %v1446 = vsel %vm513, %v1444, %v1445
      %v1447 = vrot.slane %v1380, 1
      %v1448 = vsel %vm513, %v1445, %v1447
      %v1449 = vrot.slane %v1365, 1
      %v1450 = vrot.slane %v1281, 1
      %v1451 = vsel %vm513, %v1449, %v1450
      %v1452 = vrot.slane %v1381, 1
      %v1453 = vsel %vm513, %v1450, %v1452
      %v1454 = vrot.slane %v1366, 1
      %v1455 = vrot.slane %v1284, 1
      %v1456 = vsel %vm513, %v1454, %v1455
      %v1457 = vrot.slane %v1382, 1
      %v1458 = vsel %vm513, %v1455, %v1457
      %v1459 = vrot.slane %v1367, 1
      %v1460 = vrot.slane %v1287, 1
      %v1461 = vsel %vm513, %v1459, %v1460
      %v1462 = vrot.slane %v1383, 1
      %v1463 = vsel %vm513, %v1460, %v1462
      %v1464 = vrot.slane %v1368, 1
      %v1465 = vrot.slane %v1290, 1
      %v1466 = vsel %vm513, %v1464, %v1465
      %v1467 = vrot.slane %v1384, 1
      %v1468 = vsel %vm513, %v1465, %v1467
      %v1469 = vrot.slane %v1369, 1
      %v1470 = vrot.slane %v1293, 1
      %v1471 = vsel %vm513, %v1469, %v1470
      %v1472 = vrot.slane %v1385, 1
      %v1473 = vsel %vm513, %v1470, %v1472
      %v1474 = vrot.slane %v1370, 1
      %v1475 = vrot.slane %v1296, 1
      %v1476 = vsel %vm513, %v1474, %v1475
      %v1477 = vrot.slane %v1386, 1
      %v1478 = vsel %vm513, %v1475, %v1477
      %v1479 = vrot.slane %v1371, 1
      %v1480 = vrot.slane %v1299, 1
      %v1481 = vsel %vm513, %v1479, %v1480
      %v1482 = vrot.slane %v1387, 1
      %v1483 = vsel %vm513, %v1480, %v1482
      %v1484 = vrot.slane %v1372, 1
      %v1485 = vrot.slane %v1302, 1
      %v1486 = vsel %vm513, %v1484, %v1485
      %v1487 = vrot.slane %v1388, 1
      %v1488 = vsel %vm513, %v1485, %v1487
      %v1489 = vrot.slane %v1373, 1
      %v1490 = vrot.slane %v1305, 1
      %v1491 = vsel %vm513, %v1489, %v1490
      %v1492 = vrot.slane %v1389, 1
      %v1493 = vsel %vm513, %v1490, %v1492
      %v1494 = vrot.slane %v1374, 1
      %v1495 = vrot.slane %v1308, 1
      %v1496 = vsel %vm513, %v1494, %v1495
      %v1497 = vrot.slane %v1390, 1
      %v1498 = vsel %vm513, %v1495, %v1497
      %v1499 = vrot.slane %v1375, 1
      %v1500 = vrot.slane %v1311, 1
      %v1501 = vsel %vm513, %v1499, %v1500
      %v1502 = vrot.slane %v1391, 1
      %v1503 = vsel %vm513, %v1500, %v1502
      %v1536 = vmax.f32 %v1360, %v1426
      %v1537 = vmax.f32 %v1266, %v1428
      %v1538 = vmax.f32 %v1361, %v1431
      %v1539 = vmax.f32 %v1269, %v1433
      %v1540 = vmax.f32 %v1362, %v1436
      %v1541 = vmax.f32 %v1272, %v1438
      %v1542 = vmax.f32 %v1363, %v1441
      %v1543 = vmax.f32 %v1275, %v1443
      %v1544 = vmax.f32 %v1364, %v1446
      %v1545 = vmax.f32 %v1278, %v1448
      %v1546 = vmax.f32 %v1365, %v1451
      %v1547 = vmax.f32 %v1281, %v1453
      %v1548 = vmax.f32 %v1366, %v1456
      %v1549 = vmax.f32 %v1284, %v1458
      %v1550 = vmax.f32 %v1367, %v1461
      %v1551 = vmax.f32 %v1287, %v1463
      %v1552 = vmax.f32 %v1368, %v1466
      %v1553 = vmax.f32 %v1290, %v1468
      %v1554 = vmax.f32 %v1369, %v1471
      %v1555 = vmax.f32 %v1293, %v1473
      %v1556 = vmax.f32 %v1370, %v1476
      %v1557 = vmax.f32 %v1296, %v1478
      %v1558 = vmax.f32 %v1371, %v1481
      %v1559 = vmax.f32 %v1299, %v1483
      %v1560 = vmax.f32 %v1372, %v1486
      %v1561 = vmax.f32 %v1302, %v1488
      %v1562 = vmax.f32 %v1373, %v1491
      %v1563 = vmax.f32 %v1305, %v1493
      %v1564 = vmax.f32 %v1374, %v1496
      %v1565 = vmax.f32 %v1308, %v1498
      %v1566 = vmax.f32 %v1375, %v1501
      %v1567 = vmax.f32 %v1311, %v1503
      %v1568 = vrot.slane %v1360, 2
      %v1569 = vrot.slane %v1266, 2
      %v1570 = vsel %vm658, %v1568, %v1569
      %v1571 = vrot.slane %v1376, 2
      %v1572 = vsel %vm658, %v1569, %v1571
      %v1573 = vrot.slane %v1361, 2
      %v1574 = vrot.slane %v1269, 2
      %v1575 = vsel %vm658, %v1573, %v1574
      %v1576 = vrot.slane %v1377, 2
      %v1577 = vsel %vm658, %v1574, %v1576
      %v1578 = vrot.slane %v1362, 2
      %v1579 = vrot.slane %v1272, 2
      %v1580 = vsel %vm658, %v1578, %v1579
      %v1581 = vrot.slane %v1378, 2
      %v1582 = vsel %vm658, %v1579, %v1581
      %v1583 = vrot.slane %v1363, 2
      %v1584 = vrot.slane %v1275, 2
      %v1585 = vsel %vm658, %v1583, %v1584
      %v1586 = vrot.slane %v1379, 2
      %v1587 = vsel %vm658, %v1584, %v1586
      %v1588 = vrot.slane %v1364, 2
      %v1589 = vrot.slane %v1278, 2
      %v1590 = vsel %vm658, %v1588, %v1589
      %v1591 = vrot.slane %v1380, 2
      %v1592 = vsel %vm658, %v1589, %v1591
      %v1593 = vrot.slane %v1365, 2
      %v1594 = vrot.slane %v1281, 2
      %v1595 = vsel %vm658, %v1593, %v1594
      %v1596 = vrot.slane %v1381, 2
      %v1597 = vsel %vm658, %v1594, %v1596
      %v1598 = vrot.slane %v1366, 2
      %v1599 = vrot.slane %v1284, 2
      %v1600 = vsel %vm658, %v1598, %v1599
      %v1601 = vrot.slane %v1382, 2
      %v1602 = vsel %vm658, %v1599, %v1601
      %v1603 = vrot.slane %v1367, 2
      %v1604 = vrot.slane %v1287, 2
      %v1605 = vsel %vm658, %v1603, %v1604
      %v1606 = vrot.slane %v1383, 2
      %v1607 = vsel %vm658, %v1604, %v1606
      %v1608 = vrot.slane %v1368, 2
      %v1609 = vrot.slane %v1290, 2
      %v1610 = vsel %vm658, %v1608, %v1609
      %v1611 = vrot.slane %v1384, 2
      %v1612 = vsel %vm658, %v1609, %v1611
      %v1613 = vrot.slane %v1369, 2
      %v1614 = vrot.slane %v1293, 2
      %v1615 = vsel %vm658, %v1613, %v1614
      %v1616 = vrot.slane %v1385, 2
      %v1617 = vsel %vm658, %v1614, %v1616
      %v1618 = vrot.slane %v1370, 2
      %v1619 = vrot.slane %v1296, 2
      %v1620 = vsel %vm658, %v1618, %v1619
      %v1621 = vrot.slane %v1386, 2
      %v1622 = vsel %vm658, %v1619, %v1621
      %v1623 = vrot.slane %v1371, 2
      %v1624 = vrot.slane %v1299, 2
      %v1625 = vsel %vm658, %v1623, %v1624
      %v1626 = vrot.slane %v1387, 2
      %v1627 = vsel %vm658, %v1624, %v1626
      %v1628 = vrot.slane %v1372, 2
      %v1629 = vrot.slane %v1302, 2
      %v1630 = vsel %vm658, %v1628, %v1629
      %v1631 = vrot.slane %v1388, 2
      %v1632 = vsel %vm658, %v1629, %v1631
      %v1633 = vrot.slane %v1373, 2
      %v1634 = vrot.slane %v1305, 2
      %v1635 = vsel %vm658, %v1633, %v1634
      %v1636 = vrot.slane %v1389, 2
      %v1637 = vsel %vm658, %v1634, %v1636
      %v1638 = vrot.slane %v1374, 2
      %v1639 = vrot.slane %v1308, 2
      %v1640 = vsel %vm658, %v1638, %v1639
      %v1641 = vrot.slane %v1390, 2
      %v1642 = vsel %vm658, %v1639, %v1641
      %v1643 = vrot.slane %v1375, 2
      %v1644 = vrot.slane %v1311, 2
      %v1645 = vsel %vm658, %v1643, %v1644
      %v1646 = vrot.slane %v1391, 2
      %v1647 = vsel %vm658, %v1644, %v1646
      %v1680 = vmax.f32 %v1536, %v1570
      %v1681 = vmax.f32 %v1537, %v1572
      %v1682 = vmax.f32 %v1538, %v1575
      %v1683 = vmax.f32 %v1539, %v1577
      %v1684 = vmax.f32 %v1540, %v1580
      %v1685 = vmax.f32 %v1541, %v1582
      %v1686 = vmax.f32 %v1542, %v1585
      %v1687 = vmax.f32 %v1543, %v1587
      %v1688 = vmax.f32 %v1544, %v1590
      %v1689 = vmax.f32 %v1545, %v1592
      %v1690 = vmax.f32 %v1546, %v1595
      %v1691 = vmax.f32 %v1547, %v1597
      %v1692 = vmax.f32 %v1548, %v1600
      %v1693 = vmax.f32 %v1549, %v1602
      %v1694 = vmax.f32 %v1550, %v1605
      %v1695 = vmax.f32 %v1551, %v1607
      %v1696 = vmax.f32 %v1552, %v1610
      %v1697 = vmax.f32 %v1553, %v1612
      %v1698 = vmax.f32 %v1554, %v1615
      %v1699 = vmax.f32 %v1555, %v1617
      %v1700 = vmax.f32 %v1556, %v1620
      %v1701 = vmax.f32 %v1557, %v1622
      %v1702 = vmax.f32 %v1558, %v1625
      %v1703 = vmax.f32 %v1559, %v1627
      %v1704 = vmax.f32 %v1560, %v1630
      %v1705 = vmax.f32 %v1561, %v1632
      %v1706 = vmax.f32 %v1562, %v1635
      %v1707 = vmax.f32 %v1563, %v1637
      %v1708 = vmax.f32 %v1564, %v1640
      %v1709 = vmax.f32 %v1565, %v1642
      %v1710 = vmax.f32 %v1566, %v1645
      %v1711 = vmax.f32 %v1567, %v1647
      %v1712 = vrot.slane %v1360, 3
      %v1713 = vrot.slane %v1266, 3
      %v1714 = vsel %vm803, %v1712, %v1713
      %v1715 = vrot.slane %v1376, 3
      %v1716 = vsel %vm803, %v1713, %v1715
      %v1717 = vrot.slane %v1361, 3
      %v1718 = vrot.slane %v1269, 3
      %v1719 = vsel %vm803, %v1717, %v1718
      %v1720 = vrot.slane %v1377, 3
      %v1721 = vsel %vm803, %v1718, %v1720
      %v1722 = vrot.slane %v1362, 3
      %v1723 = vrot.slane %v1272, 3
      %v1724 = vsel %vm803, %v1722, %v1723
      %v1725 = vrot.slane %v1378, 3
      %v1726 = vsel %vm803, %v1723, %v1725
      %v1727 = vrot.slane %v1363, 3
      %v1728 = vrot.slane %v1275, 3
      %v1729 = vsel %vm803, %v1727, %v1728
      %v1730 = vrot.slane %v1379, 3
      %v1731 = vsel %vm803, %v1728, %v1730
      %v1732 = vrot.slane %v1364, 3
      %v1733 = vrot.slane %v1278, 3
      %v1734 = vsel %vm803, %v1732, %v1733
      %v1735 = vrot.slane %v1380, 3
      %v1736 = vsel %vm803, %v1733, %v1735
      %v1737 = vrot.slane %v1365, 3
      %v1738 = vrot.slane %v1281, 3
      %v1739 = vsel %vm803, %v1737, %v1738
      %v1740 = vrot.slane %v1381, 3
      %v1741 = vsel %vm803, %v1738, %v1740
      %v1742 = vrot.slane %v1366, 3
      %v1743 = vrot.slane %v1284, 3
      %v1744 = vsel %vm803, %v1742, %v1743
      %v1745 = vrot.slane %v1382, 3
      %v1746 = vsel %vm803, %v1743, %v1745
      %v1747 = vrot.slane %v1367, 3
      %v1748 = vrot.slane %v1287, 3
      %v1749 = vsel %vm803, %v1747, %v1748
      %v1750 = vrot.slane %v1383, 3
      %v1751 = vsel %vm803, %v1748, %v1750
      %v1752 = vrot.slane %v1368, 3
      %v1753 = vrot.slane %v1290, 3
      %v1754 = vsel %vm803, %v1752, %v1753
      %v1755 = vrot.slane %v1384, 3
      %v1756 = vsel %vm803, %v1753, %v1755
      %v1757 = vrot.slane %v1369, 3
      %v1758 = vrot.slane %v1293, 3
      %v1759 = vsel %vm803, %v1757, %v1758
      %v1760 = vrot.slane %v1385, 3
      %v1761 = vsel %vm803, %v1758, %v1760
      %v1762 = vrot.slane %v1370, 3
      %v1763 = vrot.slane %v1296, 3
      %v1764 = vsel %vm803, %v1762, %v1763
      %v1765 = vrot.slane %v1386, 3
      %v1766 = vsel %vm803, %v1763, %v1765
      %v1767 = vrot.slane %v1371, 3
      %v1768 = vrot.slane %v1299, 3
      %v1769 = vsel %vm803, %v1767, %v1768
      %v1770 = vrot.slane %v1387, 3
      %v1771 = vsel %vm803, %v1768, %v1770
      %v1772 = vrot.slane %v1372, 3
      %v1773 = vrot.slane %v1302, 3
      %v1774 = vsel %vm803, %v1772, %v1773
      %v1775 = vrot.slane %v1388, 3
      %v1776 = vsel %vm803, %v1773, %v1775
      %v1777 = vrot.slane %v1373, 3
      %v1778 = vrot.slane %v1305, 3
      %v1779 = vsel %vm803, %v1777, %v1778
      %v1780 = vrot.slane %v1389, 3
      %v1781 = vsel %vm803, %v1778, %v1780
      %v1782 = vrot.slane %v1374, 3
      %v1783 = vrot.slane %v1308, 3
      %v1784 = vsel %vm803, %v1782, %v1783
      %v1785 = vrot.slane %v1390, 3
      %v1786 = vsel %vm803, %v1783, %v1785
      %v1787 = vrot.slane %v1375, 3
      %v1788 = vrot.slane %v1311, 3
      %v1789 = vsel %vm803, %v1787, %v1788
      %v1790 = vrot.slane %v1391, 3
      %v1791 = vsel %vm803, %v1788, %v1790
      %v1824 = vmax.f32 %v1680, %v1714
      %v1825 = vmax.f32 %v1681, %v1716
      %v1826 = vmax.f32 %v1682, %v1719
      %v1827 = vmax.f32 %v1683, %v1721
      %v1828 = vmax.f32 %v1684, %v1724
      %v1829 = vmax.f32 %v1685, %v1726
      %v1830 = vmax.f32 %v1686, %v1729
      %v1831 = vmax.f32 %v1687, %v1731
      %v1832 = vmax.f32 %v1688, %v1734
      %v1833 = vmax.f32 %v1689, %v1736
      %v1834 = vmax.f32 %v1690, %v1739
      %v1835 = vmax.f32 %v1691, %v1741
      %v1836 = vmax.f32 %v1692, %v1744
      %v1837 = vmax.f32 %v1693, %v1746
      %v1838 = vmax.f32 %v1694, %v1749
      %v1839 = vmax.f32 %v1695, %v1751
      %v1840 = vmax.f32 %v1696, %v1754
      %v1841 = vmax.f32 %v1697, %v1756
      %v1842 = vmax.f32 %v1698, %v1759
      %v1843 = vmax.f32 %v1699, %v1761
      %v1844 = vmax.f32 %v1700, %v1764
      %v1845 = vmax.f32 %v1701, %v1766
      %v1846 = vmax.f32 %v1702, %v1769
      %v1847 = vmax.f32 %v1703, %v1771
      %v1848 = vmax.f32 %v1704, %v1774
      %v1849 = vmax.f32 %v1705, %v1776
      %v1850 = vmax.f32 %v1706, %v1779
      %v1851 = vmax.f32 %v1707, %v1781
      %v1852 = vmax.f32 %v1708, %v1784
      %v1853 = vmax.f32 %v1709, %v1786
      %v1854 = vmax.f32 %v1710, %v1789
      %v1855 = vmax.f32 %v1711, %v1791
      %v1856 = vrot.slane %v1360, 4
      %v1857 = vrot.slane %v1266, 4
      %v1858 = vsel %vm948, %v1856, %v1857
      %v1859 = vrot.slane %v1376, 4
      %v1860 = vsel %vm948, %v1857, %v1859
      %v1861 = vrot.slane %v1361, 4
      %v1862 = vrot.slane %v1269, 4
      %v1863 = vsel %vm948, %v1861, %v1862
      %v1864 = vrot.slane %v1377, 4
      %v1865 = vsel %vm948, %v1862, %v1864
      %v1866 = vrot.slane %v1362, 4
      %v1867 = vrot.slane %v1272, 4
      %v1868 = vsel %vm948, %v1866, %v1867
      %v1869 = vrot.slane %v1378, 4
      %v1870 = vsel %vm948, %v1867, %v1869
      %v1871 = vrot.slane %v1363, 4
      %v1872 = vrot.slane %v1275, 4
      %v1873 = vsel %vm948, %v1871, %v1872
      %v1874 = vrot.slane %v1379, 4
      %v1875 = vsel %vm948, %v1872, %v1874
      %v1876 = vrot.slane %v1364, 4
      %v1877 = vrot.slane %v1278, 4
      %v1878 = vsel %vm948, %v1876, %v1877
      %v1879 = vrot.slane %v1380, 4
      %v1880 = vsel %vm948, %v1877, %v1879
      %v1881 = vrot.slane %v1365, 4
      %v1882 = vrot.slane %v1281, 4
      %v1883 = vsel %vm948, %v1881, %v1882
      %v1884 = vrot.slane %v1381, 4
      %v1885 = vsel %vm948, %v1882, %v1884
      %v1886 = vrot.slane %v1366, 4
      %v1887 = vrot.slane %v1284, 4
      %v1888 = vsel %vm948, %v1886, %v1887
      %v1889 = vrot.slane %v1382, 4
      %v1890 = vsel %vm948, %v1887, %v1889
      %v1891 = vrot.slane %v1367, 4
      %v1892 = vrot.slane %v1287, 4
      %v1893 = vsel %vm948, %v1891, %v1892
      %v1894 = vrot.slane %v1383, 4
      %v1895 = vsel %vm948, %v1892, %v1894
      %v1896 = vrot.slane %v1368, 4
      %v1897 = vrot.slane %v1290, 4
      %v1898 = vsel %vm948, %v1896, %v1897
      %v1899 = vrot.slane %v1384, 4
      %v1900 = vsel %vm948, %v1897, %v1899
      %v1901 = vrot.slane %v1369, 4
      %v1902 = vrot.slane %v1293, 4
      %v1903 = vsel %vm948, %v1901, %v1902
      %v1904 = vrot.slane %v1385, 4
      %v1905 = vsel %vm948, %v1902, %v1904
      %v1906 = vrot.slane %v1370, 4
      %v1907 = vrot.slane %v1296, 4
      %v1908 = vsel %vm948, %v1906, %v1907
      %v1909 = vrot.slane %v1386, 4
      %v1910 = vsel %vm948, %v1907, %v1909
      %v1911 = vrot.slane %v1371, 4
      %v1912 = vrot.slane %v1299, 4
      %v1913 = vsel %vm948, %v1911, %v1912
      %v1914 = vrot.slane %v1387, 4
      %v1915 = vsel %vm948, %v1912, %v1914
      %v1916 = vrot.slane %v1372, 4
      %v1917 = vrot.slane %v1302, 4
      %v1918 = vsel %vm948, %v1916, %v1917
      %v1919 = vrot.slane %v1388, 4
      %v1920 = vsel %vm948, %v1917, %v1919
      %v1921 = vrot.slane %v1373, 4
      %v1922 = vrot.slane %v1305, 4
      %v1923 = vsel %vm948, %v1921, %v1922
      %v1924 = vrot.slane %v1389, 4
      %v1925 = vsel %vm948, %v1922, %v1924
      %v1926 = vrot.slane %v1374, 4
      %v1927 = vrot.slane %v1308, 4
      %v1928 = vsel %vm948, %v1926, %v1927
      %v1929 = vrot.slane %v1390, 4
      %v1930 = vsel %vm948, %v1927, %v1929
      %v1931 = vrot.slane %v1375, 4
      %v1932 = vrot.slane %v1311, 4
      %v1933 = vsel %vm948, %v1931, %v1932
      %v1934 = vrot.slane %v1391, 4
      %v1935 = vsel %vm948, %v1932, %v1934
      %v1968 = vmax.f32 %v1824, %v1858
      %v1969 = vmax.f32 %v1825, %v1860
      %v1970 = vmax.f32 %v1826, %v1863
      %v1971 = vmax.f32 %v1827, %v1865
      %v1972 = vmax.f32 %v1828, %v1868
      %v1973 = vmax.f32 %v1829, %v1870
      %v1974 = vmax.f32 %v1830, %v1873
      %v1975 = vmax.f32 %v1831, %v1875
      %v1976 = vmax.f32 %v1832, %v1878
      %v1977 = vmax.f32 %v1833, %v1880
      %v1978 = vmax.f32 %v1834, %v1883
      %v1979 = vmax.f32 %v1835, %v1885
      %v1980 = vmax.f32 %v1836, %v1888
      %v1981 = vmax.f32 %v1837, %v1890
      %v1982 = vmax.f32 %v1838, %v1893
      %v1983 = vmax.f32 %v1839, %v1895
      %v1984 = vmax.f32 %v1840, %v1898
      %v1985 = vmax.f32 %v1841, %v1900
      %v1986 = vmax.f32 %v1842, %v1903
      %v1987 = vmax.f32 %v1843, %v1905
      %v1988 = vmax.f32 %v1844, %v1908
      %v1989 = vmax.f32 %v1845, %v1910
      %v1990 = vmax.f32 %v1846, %v1913
      %v1991 = vmax.f32 %v1847, %v1915
      %v1992 = vmax.f32 %v1848, %v1918
      %v1993 = vmax.f32 %v1849, %v1920
      %v1994 = vmax.f32 %v1850, %v1923
      %v1995 = vmax.f32 %v1851, %v1925
      %v1996 = vmax.f32 %v1852, %v1928
      %v1997 = vmax.f32 %v1853, %v1930
      %v1998 = vmax.f32 %v1854, %v1933
      %v1999 = vmax.f32 %v1855, %v1935
      %s2000 = scalar_lea.vmem %s147, 256
      %2001 = vst.msk [vmem:[%s2000] sm:$0xff] %vm181, %v1968
      %2002 = vst.msk [vmem:[%s2000 + $0x8] sm:$0xff] %vm181, %v1969
      %2003 = vst.msk [vmem:[%s2000 + $0x10] sm:$0xff] %vm181, %v1970
      %2004 = vst.msk [vmem:[%s2000 + $0x18] sm:$0xff] %vm181, %v1971
      %2005 = vst.msk [vmem:[%s2000 + $0x20] sm:$0xff] %vm181, %v1972
      %2006 = vst.msk [vmem:[%s2000 + $0x28] sm:$0xff] %vm181, %v1973
      %2007 = vst.msk [vmem:[%s2000 + $0x30] sm:$0xff] %vm181, %v1974
      %2008 = vst.msk [vmem:[%s2000 + $0x38] sm:$0xff] %vm181, %v1975
      %2009 = vst.msk [vmem:[%s2000 + $0x40] sm:$0xff] %vm181, %v1976
      %2010 = vst.msk [vmem:[%s2000 + $0x48] sm:$0xff] %vm181, %v1977
      %2011 = vst.msk [vmem:[%s2000 + $0x50] sm:$0xff] %vm181, %v1978
      %2012 = vst.msk [vmem:[%s2000 + $0x58] sm:$0xff] %vm181, %v1979
      %2013 = vst.msk [vmem:[%s2000 + $0x60] sm:$0xff] %vm181, %v1980
      %2014 = vst.msk [vmem:[%s2000 + $0x68] sm:$0xff] %vm181, %v1981
      %2015 = vst.msk [vmem:[%s2000 + $0x70] sm:$0xff] %vm181, %v1982
      %2016 = vst.msk [vmem:[%s2000 + $0x78] sm:$0xff] %vm181, %v1983
      %2017 = vst.msk [vmem:[%s2000 + $0x80] sm:$0xff] %vm181, %v1984
      %2018 = vst.msk [vmem:[%s2000 + $0x88] sm:$0xff] %vm181, %v1985
      %2019 = vst.msk [vmem:[%s2000 + $0x90] sm:$0xff] %vm181, %v1986
      %2020 = vst.msk [vmem:[%s2000 + $0x98] sm:$0xff] %vm181, %v1987
      %2021 = vst.msk [vmem:[%s2000 + $0xa0] sm:$0xff] %vm181, %v1988
      %2022 = vst.msk [vmem:[%s2000 + $0xa8] sm:$0xff] %vm181, %v1989
      %2023 = vst.msk [vmem:[%s2000 + $0xb0] sm:$0xff] %vm181, %v1990
      %2024 = vst.msk [vmem:[%s2000 + $0xb8] sm:$0xff] %vm181, %v1991
      %2025 = vst.msk [vmem:[%s2000 + $0xc0] sm:$0xff] %vm181, %v1992
      %2026 = vst.msk [vmem:[%s2000 + $0xc8] sm:$0xff] %vm181, %v1993
      %2027 = vst.msk [vmem:[%s2000 + $0xd0] sm:$0xff] %vm181, %v1994
      %2028 = vst.msk [vmem:[%s2000 + $0xd8] sm:$0xff] %vm181, %v1995
      %2029 = vst.msk [vmem:[%s2000 + $0xe0] sm:$0xff] %vm181, %v1996
      %2030 = vst.msk [vmem:[%s2000 + $0xe8] sm:$0xff] %vm181, %v1997
      %2031 = vst.msk [vmem:[%s2000 + $0xf0] sm:$0xff] %vm181, %v1998
      %2032 = vst.msk [vmem:[%s2000 + $0xf8] sm:$0xff] %vm181, %v1999
      %v2033 = vmax.f32 %v1968, %v1970
      %v2034 = vmax.f32 %v1969, %v1971
      %v2035 = vmax.f32 %v1970, %v1972
      %v2036 = vmax.f32 %v1971, %v1973
      %v2037 = vmax.f32 %v1972, %v1974
      %v2038 = vmax.f32 %v1973, %v1975
      %v2039 = vmax.f32 %v1974, %v1976
      %v2040 = vmax.f32 %v1975, %v1977
      %v2041 = vmax.f32 %v1976, %v1978
      %v2042 = vmax.f32 %v1977, %v1979
      %v2043 = vmax.f32 %v1978, %v1980
      %v2044 = vmax.f32 %v1979, %v1981
      %v2045 = vmax.f32 %v1980, %v1982
      %v2046 = vmax.f32 %v1981, %v1983
      %v2047 = vmax.f32 %v1982, %v1984
      %v2048 = vmax.f32 %v1983, %v1985
      %v2049 = vmax.f32 %v1984, %v1986
      %v2050 = vmax.f32 %v1985, %v1987
      %v2051 = vmax.f32 %v1986, %v1988
      %v2052 = vmax.f32 %v1987, %v1989
      %v2053 = vmax.f32 %v1988, %v1990
      %v2054 = vmax.f32 %v1989, %v1991
      %v2055 = vmax.f32 %v1990, %v1992
      %v2056 = vmax.f32 %v1991, %v1993
      %v2057 = vmax.f32 %v1992, %v1994
      %v2058 = vmax.f32 %v1993, %v1995
      %v2059 = vmax.f32 %v1994, %v1996
      %v2060 = vmax.f32 %v1995, %v1997
      %v2061 = vmax.f32 %v2033, %v1972
      %v2062 = vmax.f32 %v2034, %v1973
      %v2063 = vmax.f32 %v2035, %v1974
      %v2064 = vmax.f32 %v2036, %v1975
      %v2065 = vmax.f32 %v2037, %v1976
      %v2066 = vmax.f32 %v2038, %v1977
      %v2067 = vmax.f32 %v2039, %v1978
      %v2068 = vmax.f32 %v2040, %v1979
      %v2069 = vmax.f32 %v2041, %v1980
      %v2070 = vmax.f32 %v2042, %v1981
      %v2071 = vmax.f32 %v2043, %v1982
      %v2072 = vmax.f32 %v2044, %v1983
      %v2073 = vmax.f32 %v2045, %v1984
      %v2074 = vmax.f32 %v2046, %v1985
      %v2075 = vmax.f32 %v2047, %v1986
      %v2076 = vmax.f32 %v2048, %v1987
      %v2077 = vmax.f32 %v2049, %v1988
      %v2078 = vmax.f32 %v2050, %v1989
      %v2079 = vmax.f32 %v2051, %v1990
      %v2080 = vmax.f32 %v2052, %v1991
      %v2081 = vmax.f32 %v2053, %v1992
      %v2082 = vmax.f32 %v2054, %v1993
      %v2083 = vmax.f32 %v2055, %v1994
      %v2084 = vmax.f32 %v2056, %v1995
      %v2085 = vmax.f32 %v2057, %v1996
      %v2086 = vmax.f32 %v2058, %v1997
      %v2087 = vmax.f32 %v2059, %v1998
      %v2088 = vmax.f32 %v2060, %v1999
      %v2089 = vmax.f32 %v2061, %v1974
      %v2090 = vmax.f32 %v2062, %v1975
      %v2091 = vmax.f32 %v2063, %v1976
      %v2092 = vmax.f32 %v2064, %v1977
      %v2093 = vmax.f32 %v2065, %v1978
      %v2094 = vmax.f32 %v2066, %v1979
      %v2095 = vmax.f32 %v2067, %v1980
      %v2096 = vmax.f32 %v2068, %v1981
      %v2097 = vmax.f32 %v2069, %v1982
      %v2098 = vmax.f32 %v2070, %v1983
      %v2099 = vmax.f32 %v2071, %v1984
      %v2100 = vmax.f32 %v2072, %v1985
      %v2101 = vmax.f32 %v2073, %v1986
      %v2102 = vmax.f32 %v2074, %v1987
      %v2103 = vmax.f32 %v2075, %v1988
      %v2104 = vmax.f32 %v2076, %v1989
      %v2105 = vmax.f32 %v2077, %v1990
      %v2106 = vmax.f32 %v2078, %v1991
      %v2107 = vmax.f32 %v2079, %v1992
      %v2108 = vmax.f32 %v2080, %v1993
      %v2109 = vmax.f32 %v2081, %v1994
      %v2110 = vmax.f32 %v2082, %v1995
      %v2111 = vmax.f32 %v2083, %v1996
      %v2112 = vmax.f32 %v2084, %v1997
      %v2113 = vmax.f32 %v2085, %v1998
      %v2114 = vmax.f32 %v2086, %v1999
      %v2115 = vmax.f32 %v2089, %v1976
      %v2116 = vmax.f32 %v2090, %v1977
      %v2117 = vmax.f32 %v2091, %v1978
      %v2118 = vmax.f32 %v2092, %v1979
      %v2119 = vmax.f32 %v2093, %v1980
      %v2120 = vmax.f32 %v2094, %v1981
      %v2121 = vmax.f32 %v2095, %v1982
      %v2122 = vmax.f32 %v2096, %v1983
      %v2123 = vmax.f32 %v2097, %v1984
      %v2124 = vmax.f32 %v2098, %v1985
      %v2125 = vmax.f32 %v2099, %v1986
      %v2126 = vmax.f32 %v2100, %v1987
      %v2127 = vmax.f32 %v2101, %v1988
      %v2128 = vmax.f32 %v2102, %v1989
      %v2129 = vmax.f32 %v2103, %v1990
      %v2130 = vmax.f32 %v2104, %v1991
      %v2131 = vmax.f32 %v2105, %v1992
      %v2132 = vmax.f32 %v2106, %v1993
      %v2133 = vmax.f32 %v2107, %v1994
      %v2134 = vmax.f32 %v2108, %v1995
      %v2135 = vmax.f32 %v2109, %v1996
      %v2136 = vmax.f32 %v2110, %v1997
      %v2137 = vmax.f32 %v2111, %v1998
      %v2138 = vmax.f32 %v2112, %v1999
      %v2171 = vrot.slane %v2061, 6
      %v2172 = vrot.slane %v2062, 6
      %v2173 = vsel %vm352, %v2171, %v2172
      %v2174 = vrot.slane %v2089, 6
      %v2175 = vrot.slane %v2090, 6
      %v2176 = vsel %vm352, %v2174, %v2175
      %v2177 = vrot.slane %v2115, 6
      %v2178 = vrot.slane %v2116, 6
      %v2179 = vsel %vm352, %v2177, %v2178
      %v2180 = vrot.slane %v2117, 6
      %v2181 = vrot.slane %v2118, 6
      %v2182 = vsel %vm352, %v2180, %v2181
      %v2183 = vrot.slane %v2119, 6
      %v2184 = vrot.slane %v2120, 6
      %v2185 = vsel %vm352, %v2183, %v2184
      %v2186 = vrot.slane %v2121, 6
      %v2187 = vrot.slane %v2122, 6
      %v2188 = vsel %vm352, %v2186, %v2187
      %v2189 = vrot.slane %v2123, 6
      %v2190 = vrot.slane %v2124, 6
      %v2191 = vsel %vm352, %v2189, %v2190
      %v2192 = vrot.slane %v2125, 6
      %v2193 = vrot.slane %v2126, 6
      %v2194 = vsel %vm352, %v2192, %v2193
      %v2195 = vrot.slane %v2127, 6
      %v2196 = vrot.slane %v2128, 6
      %v2197 = vsel %vm352, %v2195, %v2196
      %v2198 = vrot.slane %v2129, 6
      %v2199 = vrot.slane %v2130, 6
      %v2200 = vsel %vm352, %v2198, %v2199
      %v2201 = vrot.slane %v2131, 6
      %v2202 = vrot.slane %v2132, 6
      %v2203 = vsel %vm352, %v2201, %v2202
      %v2204 = vrot.slane %v2133, 6
      %v2205 = vrot.slane %v2134, 6
      %v2206 = vsel %vm352, %v2204, %v2205
      %v2207 = vrot.slane %v2135, 6
      %v2208 = vrot.slane %v2136, 6
      %v2209 = vsel %vm352, %v2207, %v2208
      %v2210 = vrot.slane %v2137, 6
      %v2211 = vrot.slane %v2138, 6
      %v2212 = vsel %vm352, %v2210, %v2211
      %v2213 = vrot.slane %v2113, 6
      %v2214 = vrot.slane %v2114, 6
      %v2215 = vsel %vm352, %v2213, %v2214
      %v2216 = vrot.slane %v2087, 6
      %v2217 = vrot.slane %v2088, 6
      %v2218 = vsel %vm352, %v2216, %v2217
      %v2267 = vsel %vm352, -inf, %v2171
      %v2268 = vsel %vm352, -inf, %v2174
      %v2269 = vsel %vm352, -inf, %v2177
      %v2270 = vsel %vm352, -inf, %v2180
      %v2271 = vsel %vm352, -inf, %v2183
      %v2272 = vsel %vm352, -inf, %v2186
      %v2273 = vsel %vm352, -inf, %v2189
      %v2274 = vsel %vm352, -inf, %v2192
      %v2275 = vsel %vm352, -inf, %v2195
      %v2276 = vsel %vm352, -inf, %v2198
      %v2277 = vsel %vm352, -inf, %v2201
      %v2278 = vsel %vm352, -inf, %v2204
      %v2279 = vsel %vm352, -inf, %v2207
      %v2280 = vsel %vm352, -inf, %v2210
      %v2281 = vsel %vm352, -inf, %v2213
      %v2282 = vsel %vm352, -inf, %v2216
      %v2283 = vsel %vm352, %v2172, -inf
      %v2284 = vsel %vm352, %v2175, -inf
      %v2285 = vsel %vm352, %v2178, -inf
      %v2286 = vsel %vm352, %v2181, -inf
      %v2287 = vsel %vm352, %v2184, -inf
      %v2288 = vsel %vm352, %v2187, -inf
      %v2289 = vsel %vm352, %v2190, -inf
      %v2290 = vsel %vm352, %v2193, -inf
      %v2291 = vsel %vm352, %v2196, -inf
      %v2292 = vsel %vm352, %v2199, -inf
      %v2293 = vsel %vm352, %v2202, -inf
      %v2294 = vsel %vm352, %v2205, -inf
      %v2295 = vsel %vm352, %v2208, -inf
      %v2296 = vsel %vm352, %v2211, -inf
      %v2297 = vsel %vm352, %v2214, -inf
      %v2298 = vsel %vm352, %v2217, -inf
      %v2331 = vrot.slane %v2267, 1
      %v2332 = vrot.slane %v2173, 1
      %v2333 = vsel %vm513, %v2331, %v2332
      %v2334 = vrot.slane %v2283, 1
      %v2335 = vsel %vm513, %v2332, %v2334
      %v2336 = vrot.slane %v2268, 1
      %v2337 = vrot.slane %v2176, 1
      %v2338 = vsel %vm513, %v2336, %v2337
      %v2339 = vrot.slane %v2284, 1
      %v2340 = vsel %vm513, %v2337, %v2339
      %v2341 = vrot.slane %v2269, 1
      %v2342 = vrot.slane %v2179, 1
      %v2343 = vsel %vm513, %v2341, %v2342
      %v2344 = vrot.slane %v2285, 1
      %v2345 = vsel %vm513, %v2342, %v2344
      %v2346 = vrot.slane %v2270, 1
      %v2347 = vrot.slane %v2182, 1
      %v2348 = vsel %vm513, %v2346, %v2347
      %v2349 = vrot.slane %v2286, 1
      %v2350 = vsel %vm513, %v2347, %v2349
      %v2351 = vrot.slane %v2271, 1
      %v2352 = vrot.slane %v2185, 1
      %v2353 = vsel %vm513, %v2351, %v2352
      %v2354 = vrot.slane %v2287, 1
      %v2355 = vsel %vm513, %v2352, %v2354
      %v2356 = vrot.slane %v2272, 1
      %v2357 = vrot.slane %v2188, 1
      %v2358 = vsel %vm513, %v2356, %v2357
      %v2359 = vrot.slane %v2288, 1
      %v2360 = vsel %vm513, %v2357, %v2359
      %v2361 = vrot.slane %v2273, 1
      %v2362 = vrot.slane %v2191, 1
      %v2363 = vsel %vm513, %v2361, %v2362
      %v2364 = vrot.slane %v2289, 1
      %v2365 = vsel %vm513, %v2362, %v2364
      %v2366 = vrot.slane %v2274, 1
      %v2367 = vrot.slane %v2194, 1
      %v2368 = vsel %vm513, %v2366, %v2367
      %v2369 = vrot.slane %v2290, 1
      %v2370 = vsel %vm513, %v2367, %v2369
      %v2371 = vrot.slane %v2275, 1
      %v2372 = vrot.slane %v2197, 1
      %v2373 = vsel %vm513, %v2371, %v2372
      %v2374 = vrot.slane %v2291, 1
      %v2375 = vsel %vm513, %v2372, %v2374
      %v2376 = vrot.slane %v2276, 1
      %v2377 = vrot.slane %v2200, 1
      %v2378 = vsel %vm513, %v2376, %v2377
      %v2379 = vrot.slane %v2292, 1
      %v2380 = vsel %vm513, %v2377, %v2379
      %v2381 = vrot.slane %v2277, 1
      %v2382 = vrot.slane %v2203, 1
      %v2383 = vsel %vm513, %v2381, %v2382
      %v2384 = vrot.slane %v2293, 1
      %v2385 = vsel %vm513, %v2382, %v2384
      %v2386 = vrot.slane %v2278, 1
      %v2387 = vrot.slane %v2206, 1
      %v2388 = vsel %vm513, %v2386, %v2387
      %v2389 = vrot.slane %v2294, 1
      %v2390 = vsel %vm513, %v2387, %v2389
      %v2391 = vrot.slane %v2279, 1
      %v2392 = vrot.slane %v2209, 1
      %v2393 = vsel %vm513, %v2391, %v2392
      %v2394 = vrot.slane %v2295, 1
      %v2395 = vsel %vm513, %v2392, %v2394
      %v2396 = vrot.slane %v2280, 1
      %v2397 = vrot.slane %v2212, 1
      %v2398 = vsel %vm513, %v2396, %v2397
      %v2399 = vrot.slane %v2296, 1
      %v2400 = vsel %vm513, %v2397, %v2399
      %v2401 = vrot.slane %v2281, 1
      %v2402 = vrot.slane %v2215, 1
      %v2403 = vsel %vm513, %v2401, %v2402
      %v2404 = vrot.slane %v2297, 1
      %v2405 = vsel %vm513, %v2402, %v2404
      %v2406 = vrot.slane %v2282, 1
      %v2407 = vrot.slane %v2218, 1
      %v2408 = vsel %vm513, %v2406, %v2407
      %v2409 = vrot.slane %v2298, 1
      %v2410 = vsel %vm513, %v2407, %v2409
      %v2443 = vmax.f32 %v2267, %v2333
      %v2444 = vmax.f32 %v2173, %v2335
      %v2445 = vmax.f32 %v2268, %v2338
      %v2446 = vmax.f32 %v2176, %v2340
      %v2447 = vmax.f32 %v2269, %v2343
      %v2448 = vmax.f32 %v2179, %v2345
      %v2449 = vmax.f32 %v2270, %v2348
      %v2450 = vmax.f32 %v2182, %v2350
      %v2451 = vmax.f32 %v2271, %v2353
      %v2452 = vmax.f32 %v2185, %v2355
      %v2453 = vmax.f32 %v2272, %v2358
      %v2454 = vmax.f32 %v2188, %v2360
      %v2455 = vmax.f32 %v2273, %v2363
      %v2456 = vmax.f32 %v2191, %v2365
      %v2457 = vmax.f32 %v2274, %v2368
      %v2458 = vmax.f32 %v2194, %v2370
      %v2459 = vmax.f32 %v2275, %v2373
      %v2460 = vmax.f32 %v2197, %v2375
      %v2461 = vmax.f32 %v2276, %v2378
      %v2462 = vmax.f32 %v2200, %v2380
      %v2463 = vmax.f32 %v2277, %v2383
      %v2464 = vmax.f32 %v2203, %v2385
      %v2465 = vmax.f32 %v2278, %v2388
      %v2466 = vmax.f32 %v2206, %v2390
      %v2467 = vmax.f32 %v2279, %v2393
      %v2468 = vmax.f32 %v2209, %v2395
      %v2469 = vmax.f32 %v2280, %v2398
      %v2470 = vmax.f32 %v2212, %v2400
      %v2471 = vmax.f32 %v2281, %v2403
      %v2472 = vmax.f32 %v2215, %v2405
      %v2473 = vmax.f32 %v2282, %v2408
      %v2474 = vmax.f32 %v2218, %v2410
      %v2475 = vrot.slane %v2267, 2
      %v2476 = vrot.slane %v2173, 2
      %v2477 = vsel %vm658, %v2475, %v2476
      %v2478 = vrot.slane %v2283, 2
      %v2479 = vsel %vm658, %v2476, %v2478
      %v2480 = vrot.slane %v2268, 2
      %v2481 = vrot.slane %v2176, 2
      %v2482 = vsel %vm658, %v2480, %v2481
      %v2483 = vrot.slane %v2284, 2
      %v2484 = vsel %vm658, %v2481, %v2483
      %v2485 = vrot.slane %v2269, 2
      %v2486 = vrot.slane %v2179, 2
      %v2487 = vsel %vm658, %v2485, %v2486
      %v2488 = vrot.slane %v2285, 2
      %v2489 = vsel %vm658, %v2486, %v2488
      %v2490 = vrot.slane %v2270, 2
      %v2491 = vrot.slane %v2182, 2
      %v2492 = vsel %vm658, %v2490, %v2491
      %v2493 = vrot.slane %v2286, 2
      %v2494 = vsel %vm658, %v2491, %v2493
      %v2495 = vrot.slane %v2271, 2
      %v2496 = vrot.slane %v2185, 2
      %v2497 = vsel %vm658, %v2495, %v2496
      %v2498 = vrot.slane %v2287, 2
      %v2499 = vsel %vm658, %v2496, %v2498
      %v2500 = vrot.slane %v2272, 2
      %v2501 = vrot.slane %v2188, 2
      %v2502 = vsel %vm658, %v2500, %v2501
      %v2503 = vrot.slane %v2288, 2
      %v2504 = vsel %vm658, %v2501, %v2503
      %v2505 = vrot.slane %v2273, 2
      %v2506 = vrot.slane %v2191, 2
      %v2507 = vsel %vm658, %v2505, %v2506
      %v2508 = vrot.slane %v2289, 2
      %v2509 = vsel %vm658, %v2506, %v2508
      %v2510 = vrot.slane %v2274, 2
      %v2511 = vrot.slane %v2194, 2
      %v2512 = vsel %vm658, %v2510, %v2511
      %v2513 = vrot.slane %v2290, 2
      %v2514 = vsel %vm658, %v2511, %v2513
      %v2515 = vrot.slane %v2275, 2
      %v2516 = vrot.slane %v2197, 2
      %v2517 = vsel %vm658, %v2515, %v2516
      %v2518 = vrot.slane %v2291, 2
      %v2519 = vsel %vm658, %v2516, %v2518
      %v2520 = vrot.slane %v2276, 2
      %v2521 = vrot.slane %v2200, 2
      %v2522 = vsel %vm658, %v2520, %v2521
      %v2523 = vrot.slane %v2292, 2
      %v2524 = vsel %vm658, %v2521, %v2523
      %v2525 = vrot.slane %v2277, 2
      %v2526 = vrot.slane %v2203, 2
      %v2527 = vsel %vm658, %v2525, %v2526
      %v2528 = vrot.slane %v2293, 2
      %v2529 = vsel %vm658, %v2526, %v2528
      %v2530 = vrot.slane %v2278, 2
      %v2531 = vrot.slane %v2206, 2
      %v2532 = vsel %vm658, %v2530, %v2531
      %v2533 = vrot.slane %v2294, 2
      %v2534 = vsel %vm658, %v2531, %v2533
      %v2535 = vrot.slane %v2279, 2
      %v2536 = vrot.slane %v2209, 2
      %v2537 = vsel %vm658, %v2535, %v2536
      %v2538 = vrot.slane %v2295, 2
      %v2539 = vsel %vm658, %v2536, %v2538
      %v2540 = vrot.slane %v2280, 2
      %v2541 = vrot.slane %v2212, 2
      %v2542 = vsel %vm658, %v2540, %v2541
      %v2543 = vrot.slane %v2296, 2
      %v2544 = vsel %vm658, %v2541, %v2543
      %v2545 = vrot.slane %v2281, 2
      %v2546 = vrot.slane %v2215, 2
      %v2547 = vsel %vm658, %v2545, %v2546
      %v2548 = vrot.slane %v2297, 2
      %v2549 = vsel %vm658, %v2546, %v2548
      %v2550 = vrot.slane %v2282, 2
      %v2551 = vrot.slane %v2218, 2
      %v2552 = vsel %vm658, %v2550, %v2551
      %v2553 = vrot.slane %v2298, 2
      %v2554 = vsel %vm658, %v2551, %v2553
      %v2587 = vmax.f32 %v2443, %v2477
      %v2588 = vmax.f32 %v2444, %v2479
      %v2589 = vmax.f32 %v2445, %v2482
      %v2590 = vmax.f32 %v2446, %v2484
      %v2591 = vmax.f32 %v2447, %v2487
      %v2592 = vmax.f32 %v2448, %v2489
      %v2593 = vmax.f32 %v2449, %v2492
      %v2594 = vmax.f32 %v2450, %v2494
      %v2595 = vmax.f32 %v2451, %v2497
      %v2596 = vmax.f32 %v2452, %v2499
      %v2597 = vmax.f32 %v2453, %v2502
      %v2598 = vmax.f32 %v2454, %v2504
      %v2599 = vmax.f32 %v2455, %v2507
      %v2600 = vmax.f32 %v2456, %v2509
      %v2601 = vmax.f32 %v2457, %v2512
      %v2602 = vmax.f32 %v2458, %v2514
      %v2603 = vmax.f32 %v2459, %v2517
      %v2604 = vmax.f32 %v2460, %v2519
      %v2605 = vmax.f32 %v2461, %v2522
      %v2606 = vmax.f32 %v2462, %v2524
      %v2607 = vmax.f32 %v2463, %v2527
      %v2608 = vmax.f32 %v2464, %v2529
      %v2609 = vmax.f32 %v2465, %v2532
      %v2610 = vmax.f32 %v2466, %v2534
      %v2611 = vmax.f32 %v2467, %v2537
      %v2612 = vmax.f32 %v2468, %v2539
      %v2613 = vmax.f32 %v2469, %v2542
      %v2614 = vmax.f32 %v2470, %v2544
      %v2615 = vmax.f32 %v2471, %v2547
      %v2616 = vmax.f32 %v2472, %v2549
      %v2617 = vmax.f32 %v2473, %v2552
      %v2618 = vmax.f32 %v2474, %v2554
      %v2619 = vrot.slane %v2267, 3
      %v2620 = vrot.slane %v2173, 3
      %v2621 = vsel %vm803, %v2619, %v2620
      %v2622 = vrot.slane %v2283, 3
      %v2623 = vsel %vm803, %v2620, %v2622
      %v2624 = vrot.slane %v2268, 3
      %v2625 = vrot.slane %v2176, 3
      %v2626 = vsel %vm803, %v2624, %v2625
      %v2627 = vrot.slane %v2284, 3
      %v2628 = vsel %vm803, %v2625, %v2627
      %v2629 = vrot.slane %v2269, 3
      %v2630 = vrot.slane %v2179, 3
      %v2631 = vsel %vm803, %v2629, %v2630
      %v2632 = vrot.slane %v2285, 3
      %v2633 = vsel %vm803, %v2630, %v2632
      %v2634 = vrot.slane %v2270, 3
      %v2635 = vrot.slane %v2182, 3
      %v2636 = vsel %vm803, %v2634, %v2635
      %v2637 = vrot.slane %v2286, 3
      %v2638 = vsel %vm803, %v2635, %v2637
      %v2639 = vrot.slane %v2271, 3
      %v2640 = vrot.slane %v2185, 3
      %v2641 = vsel %vm803, %v2639, %v2640
      %v2642 = vrot.slane %v2287, 3
      %v2643 = vsel %vm803, %v2640, %v2642
      %v2644 = vrot.slane %v2272, 3
      %v2645 = vrot.slane %v2188, 3
      %v2646 = vsel %vm803, %v2644, %v2645
      %v2647 = vrot.slane %v2288, 3
      %v2648 = vsel %vm803, %v2645, %v2647
      %v2649 = vrot.slane %v2273, 3
      %v2650 = vrot.slane %v2191, 3
      %v2651 = vsel %vm803, %v2649, %v2650
      %v2652 = vrot.slane %v2289, 3
      %v2653 = vsel %vm803, %v2650, %v2652
      %v2654 = vrot.slane %v2274, 3
      %v2655 = vrot.slane %v2194, 3
      %v2656 = vsel %vm803, %v2654, %v2655
      %v2657 = vrot.slane %v2290, 3
      %v2658 = vsel %vm803, %v2655, %v2657
      %v2659 = vrot.slane %v2275, 3
      %v2660 = vrot.slane %v2197, 3
      %v2661 = vsel %vm803, %v2659, %v2660
      %v2662 = vrot.slane %v2291, 3
      %v2663 = vsel %vm803, %v2660, %v2662
      %v2664 = vrot.slane %v2276, 3
      %v2665 = vrot.slane %v2200, 3
      %v2666 = vsel %vm803, %v2664, %v2665
      %v2667 = vrot.slane %v2292, 3
      %v2668 = vsel %vm803, %v2665, %v2667
      %v2669 = vrot.slane %v2277, 3
      %v2670 = vrot.slane %v2203, 3
      %v2671 = vsel %vm803, %v2669, %v2670
      %v2672 = vrot.slane %v2293, 3
      %v2673 = vsel %vm803, %v2670, %v2672
      %v2674 = vrot.slane %v2278, 3
      %v2675 = vrot.slane %v2206, 3
      %v2676 = vsel %vm803, %v2674, %v2675
      %v2677 = vrot.slane %v2294, 3
      %v2678 = vsel %vm803, %v2675, %v2677
      %v2679 = vrot.slane %v2279, 3
      %v2680 = vrot.slane %v2209, 3
      %v2681 = vsel %vm803, %v2679, %v2680
      %v2682 = vrot.slane %v2295, 3
      %v2683 = vsel %vm803, %v2680, %v2682
      %v2684 = vrot.slane %v2280, 3
      %v2685 = vrot.slane %v2212, 3
      %v2686 = vsel %vm803, %v2684, %v2685
      %v2687 = vrot.slane %v2296, 3
      %v2688 = vsel %vm803, %v2685, %v2687
      %v2689 = vrot.slane %v2281, 3
      %v2690 = vrot.slane %v2215, 3
      %v2691 = vsel %vm803, %v2689, %v2690
      %v2692 = vrot.slane %v2297, 3
      %v2693 = vsel %vm803, %v2690, %v2692
      %v2694 = vrot.slane %v2282, 3
      %v2695 = vrot.slane %v2218, 3
      %v2696 = vsel %vm803, %v2694, %v2695
      %v2697 = vrot.slane %v2298, 3
      %v2698 = vsel %vm803, %v2695, %v2697
      %v2731 = vmax.f32 %v2587, %v2621
      %v2732 = vmax.f32 %v2588, %v2623
      %v2733 = vmax.f32 %v2589, %v2626
      %v2734 = vmax.f32 %v2590, %v2628
      %v2735 = vmax.f32 %v2591, %v2631
      %v2736 = vmax.f32 %v2592, %v2633
      %v2737 = vmax.f32 %v2593, %v2636
      %v2738 = vmax.f32 %v2594, %v2638
      %v2739 = vmax.f32 %v2595, %v2641
      %v2740 = vmax.f32 %v2596, %v2643
      %v2741 = vmax.f32 %v2597, %v2646
      %v2742 = vmax.f32 %v2598, %v2648
      %v2743 = vmax.f32 %v2599, %v2651
      %v2744 = vmax.f32 %v2600, %v2653
      %v2745 = vmax.f32 %v2601, %v2656
      %v2746 = vmax.f32 %v2602, %v2658
      %v2747 = vmax.f32 %v2603, %v2661
      %v2748 = vmax.f32 %v2604, %v2663
      %v2749 = vmax.f32 %v2605, %v2666
      %v2750 = vmax.f32 %v2606, %v2668
      %v2751 = vmax.f32 %v2607, %v2671
      %v2752 = vmax.f32 %v2608, %v2673
      %v2753 = vmax.f32 %v2609, %v2676
      %v2754 = vmax.f32 %v2610, %v2678
      %v2755 = vmax.f32 %v2611, %v2681
      %v2756 = vmax.f32 %v2612, %v2683
      %v2757 = vmax.f32 %v2613, %v2686
      %v2758 = vmax.f32 %v2614, %v2688
      %v2759 = vmax.f32 %v2615, %v2691
      %v2760 = vmax.f32 %v2616, %v2693
      %v2761 = vmax.f32 %v2617, %v2696
      %v2762 = vmax.f32 %v2618, %v2698
      %v2763 = vrot.slane %v2267, 4
      %v2764 = vrot.slane %v2173, 4
      %v2765 = vsel %vm948, %v2763, %v2764
      %v2766 = vrot.slane %v2283, 4
      %v2767 = vsel %vm948, %v2764, %v2766
      %v2768 = vrot.slane %v2268, 4
      %v2769 = vrot.slane %v2176, 4
      %v2770 = vsel %vm948, %v2768, %v2769
      %v2771 = vrot.slane %v2284, 4
      %v2772 = vsel %vm948, %v2769, %v2771
      %v2773 = vrot.slane %v2269, 4
      %v2774 = vrot.slane %v2179, 4
      %v2775 = vsel %vm948, %v2773, %v2774
      %v2776 = vrot.slane %v2285, 4
      %v2777 = vsel %vm948, %v2774, %v2776
      %v2778 = vrot.slane %v2270, 4
      %v2779 = vrot.slane %v2182, 4
      %v2780 = vsel %vm948, %v2778, %v2779
      %v2781 = vrot.slane %v2286, 4
      %v2782 = vsel %vm948, %v2779, %v2781
      %v2783 = vrot.slane %v2271, 4
      %v2784 = vrot.slane %v2185, 4
      %v2785 = vsel %vm948, %v2783, %v2784
      %v2786 = vrot.slane %v2287, 4
      %v2787 = vsel %vm948, %v2784, %v2786
      %v2788 = vrot.slane %v2272, 4
      %v2789 = vrot.slane %v2188, 4
      %v2790 = vsel %vm948, %v2788, %v2789
      %v2791 = vrot.slane %v2288, 4
      %v2792 = vsel %vm948, %v2789, %v2791
      %v2793 = vrot.slane %v2273, 4
      %v2794 = vrot.slane %v2191, 4
      %v2795 = vsel %vm948, %v2793, %v2794
      %v2796 = vrot.slane %v2289, 4
      %v2797 = vsel %vm948, %v2794, %v2796
      %v2798 = vrot.slane %v2274, 4
      %v2799 = vrot.slane %v2194, 4
      %v2800 = vsel %vm948, %v2798, %v2799
      %v2801 = vrot.slane %v2290, 4
      %v2802 = vsel %vm948, %v2799, %v2801
      %v2803 = vrot.slane %v2275, 4
      %v2804 = vrot.slane %v2197, 4
      %v2805 = vsel %vm948, %v2803, %v2804
      %v2806 = vrot.slane %v2291, 4
      %v2807 = vsel %vm948, %v2804, %v2806
      %v2808 = vrot.slane %v2276, 4
      %v2809 = vrot.slane %v2200, 4
      %v2810 = vsel %vm948, %v2808, %v2809
      %v2811 = vrot.slane %v2292, 4
      %v2812 = vsel %vm948, %v2809, %v2811
      %v2813 = vrot.slane %v2277, 4
      %v2814 = vrot.slane %v2203, 4
      %v2815 = vsel %vm948, %v2813, %v2814
      %v2816 = vrot.slane %v2293, 4
      %v2817 = vsel %vm948, %v2814, %v2816
      %v2818 = vrot.slane %v2278, 4
      %v2819 = vrot.slane %v2206, 4
      %v2820 = vsel %vm948, %v2818, %v2819
      %v2821 = vrot.slane %v2294, 4
      %v2822 = vsel %vm948, %v2819, %v2821
      %v2823 = vrot.slane %v2279, 4
      %v2824 = vrot.slane %v2209, 4
      %v2825 = vsel %vm948, %v2823, %v2824
      %v2826 = vrot.slane %v2295, 4
      %v2827 = vsel %vm948, %v2824, %v2826
      %v2828 = vrot.slane %v2280, 4
      %v2829 = vrot.slane %v2212, 4
      %v2830 = vsel %vm948, %v2828, %v2829
      %v2831 = vrot.slane %v2296, 4
      %v2832 = vsel %vm948, %v2829, %v2831
      %v2833 = vrot.slane %v2281, 4
      %v2834 = vrot.slane %v2215, 4
      %v2835 = vsel %vm948, %v2833, %v2834
      %v2836 = vrot.slane %v2297, 4
      %v2837 = vsel %vm948, %v2834, %v2836
      %v2838 = vrot.slane %v2282, 4
      %v2839 = vrot.slane %v2218, 4
      %v2840 = vsel %vm948, %v2838, %v2839
      %v2841 = vrot.slane %v2298, 4
      %v2842 = vsel %vm948, %v2839, %v2841
      %v2875 = vmax.f32 %v2731, %v2765
      %v2876 = vmax.f32 %v2732, %v2767
      %v2877 = vmax.f32 %v2733, %v2770
      %v2878 = vmax.f32 %v2734, %v2772
      %v2879 = vmax.f32 %v2735, %v2775
      %v2880 = vmax.f32 %v2736, %v2777
      %v2881 = vmax.f32 %v2737, %v2780
      %v2882 = vmax.f32 %v2738, %v2782
      %v2883 = vmax.f32 %v2739, %v2785
      %v2884 = vmax.f32 %v2740, %v2787
      %v2885 = vmax.f32 %v2741, %v2790
      %v2886 = vmax.f32 %v2742, %v2792
      %v2887 = vmax.f32 %v2743, %v2795
      %v2888 = vmax.f32 %v2744, %v2797
      %v2889 = vmax.f32 %v2745, %v2800
      %v2890 = vmax.f32 %v2746, %v2802
      %v2891 = vmax.f32 %v2747, %v2805
      %v2892 = vmax.f32 %v2748, %v2807
      %v2893 = vmax.f32 %v2749, %v2810
      %v2894 = vmax.f32 %v2750, %v2812
      %v2895 = vmax.f32 %v2751, %v2815
      %v2896 = vmax.f32 %v2752, %v2817
      %v2897 = vmax.f32 %v2753, %v2820
      %v2898 = vmax.f32 %v2754, %v2822
      %v2899 = vmax.f32 %v2755, %v2825
      %v2900 = vmax.f32 %v2756, %v2827
      %v2901 = vmax.f32 %v2757, %v2830
      %v2902 = vmax.f32 %v2758, %v2832
      %v2903 = vmax.f32 %v2759, %v2835
      %v2904 = vmax.f32 %v2760, %v2837
      %v2905 = vmax.f32 %v2761, %v2840
      %v2906 = vmax.f32 %v2762, %v2842
      %2907 = vst.msk [vmem:[%s147] sm:$0xff] %vm181, %v2875
      %2908 = vst.msk [vmem:[%s147 + $0x8] sm:$0xff] %vm181, %v2876
      %2909 = vst.msk [vmem:[%s147 + $0x10] sm:$0xff] %vm181, %v2877
      %2910 = vst.msk [vmem:[%s147 + $0x18] sm:$0xff] %vm181, %v2878
      %2911 = vst.msk [vmem:[%s147 + $0x20] sm:$0xff] %vm181, %v2879
      %2912 = vst.msk [vmem:[%s147 + $0x28] sm:$0xff] %vm181, %v2880
      %2913 = vst.msk [vmem:[%s147 + $0x30] sm:$0xff] %vm181, %v2881
      %2914 = vst.msk [vmem:[%s147 + $0x38] sm:$0xff] %vm181, %v2882
      %2915 = vst.msk [vmem:[%s147 + $0x40] sm:$0xff] %vm181, %v2883
      %2916 = vst.msk [vmem:[%s147 + $0x48] sm:$0xff] %vm181, %v2884
      %2917 = vst.msk [vmem:[%s147 + $0x50] sm:$0xff] %vm181, %v2885
      %2918 = vst.msk [vmem:[%s147 + $0x58] sm:$0xff] %vm181, %v2886
      %2919 = vst.msk [vmem:[%s147 + $0x60] sm:$0xff] %vm181, %v2887
      %2920 = vst.msk [vmem:[%s147 + $0x68] sm:$0xff] %vm181, %v2888
      %2921 = vst.msk [vmem:[%s147 + $0x70] sm:$0xff] %vm181, %v2889
      %2922 = vst.msk [vmem:[%s147 + $0x78] sm:$0xff] %vm181, %v2890
      %2923 = vst.msk [vmem:[%s147 + $0x80] sm:$0xff] %vm181, %v2891
      %2924 = vst.msk [vmem:[%s147 + $0x88] sm:$0xff] %vm181, %v2892
      %2925 = vst.msk [vmem:[%s147 + $0x90] sm:$0xff] %vm181, %v2893
      %2926 = vst.msk [vmem:[%s147 + $0x98] sm:$0xff] %vm181, %v2894
      %2927 = vst.msk [vmem:[%s147 + $0xa0] sm:$0xff] %vm181, %v2895
      %2928 = vst.msk [vmem:[%s147 + $0xa8] sm:$0xff] %vm181, %v2896
      %2929 = vst.msk [vmem:[%s147 + $0xb0] sm:$0xff] %vm181, %v2897
      %2930 = vst.msk [vmem:[%s147 + $0xb8] sm:$0xff] %vm181, %v2898
      %2931 = vst.msk [vmem:[%s147 + $0xc0] sm:$0xff] %vm181, %v2899
      %2932 = vst.msk [vmem:[%s147 + $0xc8] sm:$0xff] %vm181, %v2900
      %2933 = vst.msk [vmem:[%s147 + $0xd0] sm:$0xff] %vm181, %v2901
      %2934 = vst.msk [vmem:[%s147 + $0xd8] sm:$0xff] %vm181, %v2902
      %2935 = vst.msk [vmem:[%s147 + $0xe0] sm:$0xff] %vm181, %v2903
      %2936 = vst.msk [vmem:[%s147 + $0xe8] sm:$0xff] %vm181, %v2904
      %2937 = vst.msk [vmem:[%s147 + $0xf0] sm:$0xff] %vm181, %v2905
      %2938 = vst.msk [vmem:[%s147 + $0xf8] sm:$0xff] %vm181, %v2906
      %p2939 = scmp.lt.s32.totalorder %s16, 1
      %s2940 = scalar_select %p2939, %s16, 1
      %p2941 = scmp.lt.s32.totalorder %s17, 0
      %s2942 = scalar_select %p2941, %s17, 0
      %s2943 = smul.addr %s2940, 128
      %s2944 = sadd.s32 %s2942, %s2943
      %s2945 = smul.addr %s2944, 8
      %s2946 = scalar_lea.vmem %s1, %s2945
      // Predicated region
      $region25: #{spatial_pyramid_pooling.1} parent=23 // pred_check
        %p2947 = pneg %p72
      $region26: #{spatial_pyramid_pooling.1} parent=23 // pred_check_branch
        %2949 = sbr.rel (%p2947) target = $region28
      $region27: #{spatial_pyramid_pooling.1} parent=23 // pred_region
        _
      $region28: #{spatial_pyramid_pooling.1} parent=23 // pred_fallthru
        _
    $region24: #{spatial_pyramid_pooling.1} parent=5 // pred_fallthru
      _
    %p2950 = scmp.le.s32.totalorder 2, %s7
    // Predicated region
    $region29: #{spatial_pyramid_pooling.1} parent=5 // pred_check
      %p2951 = pneg %p2950
    $region30: #{spatial_pyramid_pooling.1} parent=5 // pred_check_branch
      %2953 = sbr.rel (%p2951) target = $region32
    $region31: #{spatial_pyramid_pooling.1} parent=5 // pred_region
      %s2954 = ssub.s32 %s7, 2
      // Predicated region
      $region33: #{spatial_pyramid_pooling.1} parent=31 // pred_check
        %p2955 = pneg %p78
      $region34: #{spatial_pyramid_pooling.1} parent=31 // pred_check_branch
        %2957 = sbr.rel (%p2955) target = $region36
      $region35: #{spatial_pyramid_pooling.1} parent=31 // pred_region
        %p2958 = scmp.lt.s32.totalorder %s18, 1
        %s2959 = scalar_select %p2958, %s18, 1
        %p2960 = scmp.lt.s32.totalorder %s19, 0
        %s2961 = scalar_select %p2960, %s19, 0
        %s2962 = smul.addr %s2959, 128
        %s2963 = sadd.s32 %s2961, %s2962
        %s2964 = smul.addr %s2963, 8
        %s2965 = scalar_lea.vmem %s1, %s2964
      $region36: #{spatial_pyramid_pooling.1} parent=31 // pred_fallthru
        _
    $region32: #{spatial_pyramid_pooling.1} parent=5 // pred_fallthru
      _
  $region6: #{spatial_pyramid_pooling.1} parent=0 // loop_footer
    %s11 = sadd.s32 1, %s7
  $region7: #{spatial_pyramid_pooling.1} parent=0 // loop_footer_branch
    %6 = sbr.rel target = $region3
  $region8: #{spatial_pyramid_pooling.1} parent=0 // loop_exit
    _

</llo_original>
